<compile_context>
chip_gen: v6e
topology: v6e:2x2x1
jax: 0.10.0
libtpu: 0.0.40
codegen_flags: <defaults>
</compile_context>

<pallas_src>
import math

import jax
import jax.numpy as jnp
from jax.experimental import pallas as pl
from jax.experimental.pallas import tpu as pltpu


_LANES = 128  # pad channel dims to the 128-lane vreg width (256 optional on v6e/v7x)


def _rup(n, m=_LANES):
    return ((n + m - 1) // m) * m


def _pad_to(a, shape):
    return jnp.pad(a, [(0, s - d) for d, s in zip(a.shape, shape)])


# ---------------------------------------------------------------------------
# Fused Pallas kernel: conv1 -> conv2 -> MaxPool(2) -> fc1 -> fc2 -> fc3.
# One grid step == one batch element; everything stays resident in VMEM.
# ---------------------------------------------------------------------------
def _convnet_fused_kernel(p1_ref, w1_ref, b1_ref, w2_ref, b2_ref,
                          wf1_ref, bf1_ref, wf2_ref, bf2_ref,
                          wf3_ref, bf3_ref, out_ref):
    f32, bf16 = jnp.float32, jnp.bfloat16
    ow1 = p1_ref.shape[1]            # conv1 output width  (4 for input_size=28)
    oh1 = p1_ref.shape[2]            # conv1 output height (7k - 3)
    oh2, ow2 = oh1 - 2, ow1 - 2      # conv2 output spatial
    npool, pw = oh2 // 2, ow2 // 2   # MaxPool2d(2) output spatial (floor mode)

    # ---- conv1 (4x4, cin=1) + bias + ReLU ----------------------------------
    # One (oh1,16)@(16,CCp) matmul per conv1 output column.  Columns are kept
    # as separate 2-D tiles so conv2 only ever needs contiguous row slices.
    w1 = w1_ref[...]                 # (16, CCp) bf16
    b1 = b1_ref[...]                 # (1, CCp)  f32
    y1 = []
    for c in range(ow1):
        acc = jnp.dot(p1_ref[0, c], w1, preferred_element_type=f32) + b1
        y1.append(jnp.maximum(acc, 0.0).astype(bf16))           # (oh1, CCp)

    # ---- conv2 (3x3) + bias + ReLU: sum of 9 shifted matmuls ---------------
    b2 = b2_ref[...]
    y2 = []
    for c in range(ow2):
        acc = None
        for di in range(3):
            for dj in range(3):
                t = jnp.dot(y1[c + dj][di:di + oh2, :],
                            w2_ref[di * 3 + dj],
                            preferred_element_type=f32)
                acc = t if acc is None else acc + t
        y2.append(jnp.maximum(acc + b2, 0.0))                   # (oh2, CCp) f32

    # ---- MaxPool2d(2) fused with fc1 ---------------------------------------
    # No flatten/reshape: fc1's weight is pre-split per pooled spatial
    # position, so fc1(flatten(z)) == sum_p (pooled_row_p @ Wfc1[p]).
    h = bf1_ref[...]                                            # (1, LINp) f32
    for q in range(pw):
        zq = jnp.maximum(y2[2 * q], y2[2 * q + 1])              # (oh2, CCp)
        for p in range(npool):
            zp = jnp.maximum(zq[2 * p:2 * p + 1, :],
                             zq[2 * p + 1:2 * p + 2, :])        # (1, CCp)
            h = h + jnp.dot(zp.astype(bf16), wf1_ref[p * pw + q],
                            preferred_element_type=f32)
    h1 = jnp.maximum(h, 0.0).astype(bf16)                       # (1, LINp)

    # ---- fc2 + ReLU, fc3 ----------------------------------------------------
    h2 = jnp.maximum(
        jnp.dot(h1, wf2_ref[...], preferred_element_type=f32) + bf2_ref[...],
        0.0).astype(bf16)
    out = jnp.dot(h2, wf3_ref[...], preferred_element_type=f32) + bf3_ref[...]
    out_ref[0] = out.astype(out_ref.dtype)                      # (1, NCp)


# ---------------------------------------------------------------------------
# Parameters: raw PyTorch-like init + one-time kernel-layout preparation.
# ---------------------------------------------------------------------------
def init_params(key, conv_channels, lin_channels, k, num_classes):
    ks = jax.random.split(key, 10)

    def uni(kk, shape, fan_in):
        bound = 1.0 / math.sqrt(fan_in)
        return jax.random.uniform(kk, shape, jnp.float32, -bound, bound)

    fc1_in = conv_channels * math.floor((7 * k - 3 - 2) / 2)
    return {
        "conv1_w": uni(ks[0], (conv_channels, 1, 4, 4), 1 * 4 * 4),
        "conv1_b": uni(ks[1], (conv_channels,), 1 * 4 * 4),
        "conv2_w": uni(ks[2], (conv_channels, conv_channels, 3, 3), conv_channels * 9),
        "conv2_b": uni(ks[3], (conv_channels,), conv_channels * 9),
        "fc1_w": uni(ks[4], (fc1_in, lin_channels), fc1_in),
        "fc1_b": uni(ks[5], (lin_channels,), fc1_in),
        "fc2_w": uni(ks[6], (lin_channels, lin_channels), lin_channels),
        "fc2_b": uni(ks[7], (lin_channels,), lin_channels),
        "fc3_w": uni(ks[8], (lin_channels, num_classes), lin_channels),
        "fc3_b": uni(ks[9], (num_classes,), lin_channels),
    }


def prepare_params(params, conv_channels, lin_channels, num_classes, k,
                   input_size=28):
    """One-time layout prep: transpose/reshape/pad/cast everything the kernel
    needs so the per-call forward path does zero weight plumbing."""
    if input_size != 28:
        raise NotImplementedError("only the input_size == 28 branch is implemented")
    cc, lin, nc = conv_channels, lin_channels, num_classes
    ccp, linp, ncp = _rup(cc), _rup(lin), _rup(nc)
    oh2 = 7 * k - 5                  # conv2 output height
    npool, pw = oh2 // 2, 1          # MaxPool2d(2) output spatial (28-px branch)
    assert params["fc1_w"].shape[0] == cc * npool * pw
    bf16, f32 = jnp.bfloat16, jnp.float32

    # conv1: (CC,1,4,4) -> (16, CCp), K index = di*4 + dj
    w1 = _pad_to(params["conv1_w"].reshape(cc, 16).T, (16, ccp)).astype(bf16)
    b1 = _pad_to(params["conv1_b"], (ccp,)).reshape(1, ccp).astype(f32)

    # conv2: (CC,CC,3,3) -> 9 per-offset (CCp, CCp) matrices, index = di*3 + dj
    w2 = params["conv2_w"].transpose(2, 3, 1, 0).reshape(9, cc, cc)
    w2 = _pad_to(w2, (9, ccp, ccp)).astype(bf16)
    b2 = _pad_to(params["conv2_b"], (ccp,)).reshape(1, ccp).astype(f32)

    # fc1: split per pooled spatial position (torch flatten order is (c, h, w))
    wf1 = params["fc1_w"].reshape(cc, npool, pw, lin).transpose(1, 2, 0, 3)
    wf1 = _pad_to(wf1.reshape(npool * pw, cc, lin), (npool * pw, ccp, linp))
    wf1 = wf1.astype(bf16)
    bf1 = _pad_to(params["fc1_b"], (linp,)).reshape(1, linp).astype(f32)

    wf2 = _pad_to(params["fc2_w"], (linp, linp)).astype(bf16)
    bf2 = _pad_to(params["fc2_b"], (linp,)).reshape(1, linp).astype(f32)
    wf3 = _pad_to(params["fc3_w"], (linp, ncp)).astype(bf16)
    bf3 = _pad_to(params["fc3_b"], (ncp,)).reshape(1, ncp).astype(f32)

    return dict(w1=w1, b1=b1, w2=w2, b2=b2, wf1=wf1, bf1=bf1,
                wf2=wf2, bf2=bf2, wf3=wf3, bf3=bf3)


# ---------------------------------------------------------------------------
# Forward pass.
# ---------------------------------------------------------------------------
def convnet_forward(prepped, x, num_classes):
    """x: (B, k, C, H, W) -> logits (B, num_classes)."""
    B, k, C, H, W = x.shape
    if C != 1:
        raise NotImplementedError("ConvBlock reconstruction assumes C == 1")

    # torch: x.permute(0,2,1,3,4).reshape(B, C, k*H, W)    (layout plumbing)
    xs = jnp.transpose(x, (0, 2, 1, 3, 4)).reshape(B, C, k * H, W)[:, 0]

    # ConvBlock stage 1: MaxPool2d(4), floor mode -- tiny XLA glue (~12 KB in)
    oh0, ow0 = (k * H) // 4, W // 4
    a = xs[:, :oh0 * 4, :ow0 * 4].reshape(B, oh0, 4, ow0, 4).max(axis=(2, 4))

    # im2col for conv1 (4x4, cin=1), grouped by conv1 output column so that
    # inside the kernel all conv slicing is contiguous; cast bf16 for the MXU.
    oh1, ow1 = oh0 - 3, ow0 - 3
    cols = [a[:, di:di + oh1, dj:dj + ow1]
            for di in range(4) for dj in range(4)]
    p1 = jnp.stack(cols, axis=-1).transpose(0, 2, 1, 3)         # (B, ow1, oh1, 16)
    p1 = p1.astype(jnp.bfloat16)

    ccp = prepped["w1"].shape[1]
    linp = prepped["wf2"].shape[0]
    ncp = prepped["wf3"].shape[1]
    npw = prepped["wf1"].shape[0]

    out = pl.pallas_call(
        _convnet_fused_kernel,
        out_shape=jax.ShapeDtypeStruct((B, 1, ncp), jnp.float32),
        grid=(B,),
        in_specs=[
            pl.BlockSpec((1, ow1, oh1, 16), lambda b: (b, 0, 0, 0)),   # patches
            pl.BlockSpec((16, ccp), lambda b: (0, 0)),                 # conv1 w
            pl.BlockSpec((1, ccp), lambda b: (0, 0)),                  # conv1 b
            pl.BlockSpec((9, ccp, ccp), lambda b: (0, 0, 0)),          # conv2 w
            pl.BlockSpec((1, ccp), lambda b: (0, 0)),                  # conv2 b
            pl.BlockSpec((npw, ccp, linp), lambda b: (0, 0, 0)),       # fc1 w
            pl.BlockSpec((1, linp), lambda b: (0, 0)),                 # fc1 b
            pl.BlockSpec((linp, linp), lambda b: (0, 0)),              # fc2 w
            pl.BlockSpec((1, linp), lambda b: (0, 0)),                 # fc2 b
            pl.BlockSpec((linp, ncp), lambda b: (0, 0)),               # fc3 w
            pl.BlockSpec((1, ncp), lambda b: (0, 0)),                  # fc3 b
        ],
        out_specs=pl.BlockSpec((1, 1, ncp), lambda b: (b, 0, 0)),
        compiler_params=pltpu.CompilerParams(
            dimension_semantics=("parallel",)),      # both TensorCores on v7x
    )(p1, prepped["w1"], prepped["b1"], prepped["w2"], prepped["b2"],
      prepped["wf1"], prepped["bf1"], prepped["wf2"], prepped["bf2"],
      prepped["wf3"], prepped["bf3"])

    return out.reshape(B, ncp)[:, :num_classes]


# ---------------------------------------------------------------------------
# Plain-JAX reference (same bf16-operand / f32-accumulate numerics), used only
# as a correctness check in __main__.
# ---------------------------------------------------------------------------
def reference_forward(params, x):
    bf16, f32 = jnp.bfloat16, jnp.float32
    B, k, C, H, W = x.shape
    v = jnp.transpose(x, (0, 2, 1, 3, 4)).reshape(B, C, k * H, W)

    def pool(t, s):
        b, c, h, w = t.shape
        return t[:, :, :(h // s) * s, :(w // s) * s].reshape(
            b, c, h // s, s, w // s, s).max(axis=(3, 5))

    def conv_relu(t, w, bias):
        co, ci, kh, kw = w.shape
        b, c, h, ww = t.shape
        oh, ow = h - kh + 1, ww - kw + 1
        cols = [t[:, :, i:i + oh, j:j + ow]
                for i in range(kh) for j in range(kw)]
        p = jnp.stack(cols, axis=2).transpose(0, 3, 4, 1, 2)
        p = p.reshape(b * oh * ow, ci * kh * kw)
        y = jnp.dot(p.astype(bf16), w.reshape(co, -1).T.astype(bf16),
                    preferred_element_type=f32) + bias
        y = jnp.maximum(y, 0.0)
        return y.reshape(b, oh, ow, co).transpose(0, 3, 1, 2)

    def linear(t, w, bias, relu):
        y = jnp.dot(t.astype(bf16), w.astype(bf16),
                    preferred_element_type=f32) + bias
        return jnp.maximum(y, 0.0) if relu else y

    v = pool(v, 4)
    v = conv_relu(v, params["conv1_w"], params["conv1_b"])
    v = conv_relu(v, params["conv2_w"], params["conv2_b"])
    v = pool(v, 2)
    v = v.reshape(B, -1)
    v = linear(v, params["fc1_w"], params["fc1_b"], True)
    v = linear(v, params["fc2_w"], params["fc2_b"], True)
    v = linear(v, params["fc3_w"], params["fc3_b"], False)
    return v


if __name__ == "__main__":
    key = jax.random.PRNGKey(0)
    pkey, xkey = jax.random.split(key)

    B, k, C, H, W = 2, 2, 1, 28, 28                  # input_size == 28 branch
    conv_channels, lin_channels, num_classes = 8, 32, 10

    params = init_params(pkey, conv_channels, lin_channels, k, num_classes)
    prepped = prepare_params(params, conv_channels, lin_channels,
                             num_classes, k)
    x = jax.random.normal(xkey, (B, k, C, H, W), jnp.float32)

    fwd = jax.jit(convnet_forward, static_argnums=2)
    out = fwd(prepped, x, num_classes)
    jax.block_until_ready(out)
    assert out.shape == (B, num_classes), out.shape

    ref = reference_forward(params, x)
    err = float(jnp.max(jnp.abs(out - ref)))
    assert err < 5e-3, f"kernel/reference mismatch: max abs err = {err}"

    print("KERNEL_OK")
</pallas_src>

<mosaic_0001>
module attributes {stable_mosaic.version = 11 : i64} {
  func.func @_convnet_fused_kernel(%arg0: i32, %arg1: memref<1x4x11x16xbf16, #tpu.memory_space<vmem>>, %arg2: memref<16x128xbf16, #tpu.memory_space<vmem>>, %arg3: memref<1x128xf32, #tpu.memory_space<vmem>>, %arg4: memref<9x128x128xbf16, #tpu.memory_space<vmem>>, %arg5: memref<1x128xf32, #tpu.memory_space<vmem>>, %arg6: memref<4x128x128xbf16, #tpu.memory_space<vmem>>, %arg7: memref<1x128xf32, #tpu.memory_space<vmem>>, %arg8: memref<128x128xbf16, #tpu.memory_space<vmem>>, %arg9: memref<1x128xf32, #tpu.memory_space<vmem>>, %arg10: memref<128x128xbf16, #tpu.memory_space<vmem>>, %arg11: memref<1x128xf32, #tpu.memory_space<vmem>>, %arg12: memref<1x1x128xf32, #tpu.memory_space<vmem>>) attributes {dimension_semantics = [#tpu.dimension_semantics<parallel>], iteration_bounds = array<i64: 2>, scalar_prefetch = 0 : i64, scratch_operands = 0 : i64, tpu.core_type = #tpu.core_type<tc>, window_params = [{transform_indices = @transform_0, window_bounds = array<i64: 1, 4, 11, 16>}, {pipeline_mode = #tpu.pipeline_mode<synchronous>, transform_indices = @transform_1, window_bounds = array<i64: 16, 128>}, {pipeline_mode = #tpu.pipeline_mode<synchronous>, transform_indices = @transform_2, window_bounds = array<i64: 1, 128>}, {pipeline_mode = #tpu.pipeline_mode<synchronous>, transform_indices = @transform_3, window_bounds = array<i64: 9, 128, 128>}, {pipeline_mode = #tpu.pipeline_mode<synchronous>, transform_indices = @transform_4, window_bounds = array<i64: 1, 128>}, {pipeline_mode = #tpu.pipeline_mode<synchronous>, transform_indices = @transform_5, window_bounds = array<i64: 4, 128, 128>}, {pipeline_mode = #tpu.pipeline_mode<synchronous>, transform_indices = @transform_6, window_bounds = array<i64: 1, 128>}, {pipeline_mode = #tpu.pipeline_mode<synchronous>, transform_indices = @transform_7, window_bounds = array<i64: 128, 128>}, {pipeline_mode = #tpu.pipeline_mode<synchronous>, transform_indices = @transform_8, window_bounds = array<i64: 1, 128>}, {pipeline_mode = #tpu.pipeline_mode<synchronous>, transform_indices = @transform_9, window_bounds = array<i64: 128, 128>}, {pipeline_mode = #tpu.pipeline_mode<synchronous>, transform_indices = @transform_10, window_bounds = array<i64: 1, 128>}, {transform_indices = @transform_11, window_bounds = array<i64: 1, 1, 128>}]} {
    %c0 = arith.constant 0 : index
    %c0_0 = arith.constant 0 : index
    %0 = vector.load %arg2[%c0, %c0_0] : memref<16x128xbf16, #tpu.memory_space<vmem>>, vector<16x128xbf16>
    %c0_1 = arith.constant 0 : index
    %c0_2 = arith.constant 0 : index
    %1 = vector.load %arg3[%c0_1, %c0_2] : memref<1x128xf32, #tpu.memory_space<vmem>>, vector<1x128xf32>
    %c0_3 = arith.constant 0 : index
    %c0_4 = arith.constant 0 : index
    %c0_5 = arith.constant 0 : index
    %c0_6 = arith.constant 0 : index
    %2 = vector.load %arg1[%c0_3, %c0_4, %c0_5, %c0_6] : memref<1x4x11x16xbf16, #tpu.memory_space<vmem>>, vector<1x1x11x16xbf16>
    %3 = vector.shape_cast %2 : vector<1x1x11x16xbf16> to vector<11x16xbf16>
    %cst = arith.constant dense<0.000000e+00> : vector<11x128xf32>
    %4 = tpu.matmul %3, %0, %cst {dimension_numbers = #tpu.dot_dimension_numbers<[1], [0], [0], [1], [0, 0, 1, 1], [], []>} : vector<11x16xbf16>, vector<16x128xbf16>, vector<11x128xf32> -> vector<11x128xf32>
    %5 = vector.broadcast %1 : vector<1x128xf32> to vector<11x128xf32>
    %6 = arith.addf %4, %5 : vector<11x128xf32>
    %cst_7 = arith.constant 0.000000e+00 : f32
    %7 = vector.broadcast %cst_7 : f32 to vector<11x128xf32>
    %8 = arith.maximumf %6, %7 : vector<11x128xf32>
    %9 = arith.truncf %8 : vector<11x128xf32> to vector<11x128xbf16>
    %c0_8 = arith.constant 0 : index
    %c1 = arith.constant 1 : index
    %c0_9 = arith.constant 0 : index
    %c0_10 = arith.constant 0 : index
    %10 = vector.load %arg1[%c0_8, %c1, %c0_9, %c0_10] : memref<1x4x11x16xbf16, #tpu.memory_space<vmem>>, vector<1x1x11x16xbf16>
    %11 = vector.shape_cast %10 : vector<1x1x11x16xbf16> to vector<11x16xbf16>
    %cst_11 = arith.constant dense<0.000000e+00> : vector<11x128xf32>
    %12 = tpu.matmul %11, %0, %cst_11 {dimension_numbers = #tpu.dot_dimension_numbers<[1], [0], [0], [1], [0, 0, 1, 1], [], []>} : vector<11x16xbf16>, vector<16x128xbf16>, vector<11x128xf32> -> vector<11x128xf32>
    %13 = vector.broadcast %1 : vector<1x128xf32> to vector<11x128xf32>
    %14 = arith.addf %12, %13 : vector<11x128xf32>
    %cst_12 = arith.constant 0.000000e+00 : f32
    %15 = vector.broadcast %cst_12 : f32 to vector<11x128xf32>
    %16 = arith.maximumf %14, %15 : vector<11x128xf32>
    %17 = arith.truncf %16 : vector<11x128xf32> to vector<11x128xbf16>
    %c0_13 = arith.constant 0 : index
    %c2 = arith.constant 2 : index
    %c0_14 = arith.constant 0 : index
    %c0_15 = arith.constant 0 : index
    %18 = vector.load %arg1[%c0_13, %c2, %c0_14, %c0_15] : memref<1x4x11x16xbf16, #tpu.memory_space<vmem>>, vector<1x1x11x16xbf16>
    %19 = vector.shape_cast %18 : vector<1x1x11x16xbf16> to vector<11x16xbf16>
    %cst_16 = arith.constant dense<0.000000e+00> : vector<11x128xf32>
    %20 = tpu.matmul %19, %0, %cst_16 {dimension_numbers = #tpu.dot_dimension_numbers<[1], [0], [0], [1], [0, 0, 1, 1], [], []>} : vector<11x16xbf16>, vector<16x128xbf16>, vector<11x128xf32> -> vector<11x128xf32>
    %21 = vector.broadcast %1 : vector<1x128xf32> to vector<11x128xf32>
    %22 = arith.addf %20, %21 : vector<11x128xf32>
    %cst_17 = arith.constant 0.000000e+00 : f32
    %23 = vector.broadcast %cst_17 : f32 to vector<11x128xf32>
    %24 = arith.maximumf %22, %23 : vector<11x128xf32>
    %25 = arith.truncf %24 : vector<11x128xf32> to vector<11x128xbf16>
    %c0_18 = arith.constant 0 : index
    %c3 = arith.constant 3 : index
    %c0_19 = arith.constant 0 : index
    %c0_20 = arith.constant 0 : index
    %26 = vector.load %arg1[%c0_18, %c3, %c0_19, %c0_20] : memref<1x4x11x16xbf16, #tpu.memory_space<vmem>>, vector<1x1x11x16xbf16>
    %27 = vector.shape_cast %26 : vector<1x1x11x16xbf16> to vector<11x16xbf16>
    %cst_21 = arith.constant dense<0.000000e+00> : vector<11x128xf32>
    %28 = tpu.matmul %27, %0, %cst_21 {dimension_numbers = #tpu.dot_dimension_numbers<[1], [0], [0], [1], [0, 0, 1, 1], [], []>} : vector<11x16xbf16>, vector<16x128xbf16>, vector<11x128xf32> -> vector<11x128xf32>
    %29 = vector.broadcast %1 : vector<1x128xf32> to vector<11x128xf32>
    %30 = arith.addf %28, %29 : vector<11x128xf32>
    %cst_22 = arith.constant 0.000000e+00 : f32
    %31 = vector.broadcast %cst_22 : f32 to vector<11x128xf32>
    %32 = arith.maximumf %30, %31 : vector<11x128xf32>
    %33 = arith.truncf %32 : vector<11x128xf32> to vector<11x128xbf16>
    %c0_23 = arith.constant 0 : index
    %c0_24 = arith.constant 0 : index
    %34 = vector.load %arg5[%c0_23, %c0_24] : memref<1x128xf32, #tpu.memory_space<vmem>>, vector<1x128xf32>
    %35 = vector.extract_strided_slice %9 {offsets = [0, 0], sizes = [9, 128], strides = [1, 1]} : vector<11x128xbf16> to vector<9x128xbf16>
    %c0_25 = arith.constant 0 : index
    %c0_26 = arith.constant 0 : index
    %c0_27 = arith.constant 0 : index
    %36 = vector.load %arg4[%c0_25, %c0_26, %c0_27] : memref<9x128x128xbf16, #tpu.memory_space<vmem>>, vector<1x128x128xbf16>
    %37 = vector.shape_cast %36 : vector<1x128x128xbf16> to vector<128x128xbf16>
    %cst_28 = arith.constant dense<0.000000e+00> : vector<9x128xf32>
    %38 = tpu.matmul %35, %37, %cst_28 {dimension_numbers = #tpu.dot_dimension_numbers<[1], [0], [0], [1], [0, 0, 1, 1], [], []>} : vector<9x128xbf16>, vector<128x128xbf16>, vector<9x128xf32> -> vector<9x128xf32>
    %39 = vector.extract_strided_slice %17 {offsets = [0, 0], sizes = [9, 128], strides = [1, 1]} : vector<11x128xbf16> to vector<9x128xbf16>
    %c1_29 = arith.constant 1 : index
    %c0_30 = arith.constant 0 : index
    %c0_31 = arith.constant 0 : index
    %40 = vector.load %arg4[%c1_29, %c0_30, %c0_31] : memref<9x128x128xbf16, #tpu.memory_space<vmem>>, vector<1x128x128xbf16>
    %41 = vector.shape_cast %40 : vector<1x128x128xbf16> to vector<128x128xbf16>
    %cst_32 = arith.constant dense<0.000000e+00> : vector<9x128xf32>
    %42 = tpu.matmul %39, %41, %cst_32 {dimension_numbers = #tpu.dot_dimension_numbers<[1], [0], [0], [1], [0, 0, 1, 1], [], []>} : vector<9x128xbf16>, vector<128x128xbf16>, vector<9x128xf32> -> vector<9x128xf32>
    %43 = arith.addf %38, %42 : vector<9x128xf32>
    %44 = vector.extract_strided_slice %25 {offsets = [0, 0], sizes = [9, 128], strides = [1, 1]} : vector<11x128xbf16> to vector<9x128xbf16>
    %c2_33 = arith.constant 2 : index
    %c0_34 = arith.constant 0 : index
    %c0_35 = arith.constant 0 : index
    %45 = vector.load %arg4[%c2_33, %c0_34, %c0_35] : memref<9x128x128xbf16, #tpu.memory_space<vmem>>, vector<1x128x128xbf16>
    %46 = vector.shape_cast %45 : vector<1x128x128xbf16> to vector<128x128xbf16>
    %cst_36 = arith.constant dense<0.000000e+00> : vector<9x128xf32>
    %47 = tpu.matmul %44, %46, %cst_36 {dimension_numbers = #tpu.dot_dimension_numbers<[1], [0], [0], [1], [0, 0, 1, 1], [], []>} : vector<9x128xbf16>, vector<128x128xbf16>, vector<9x128xf32> -> vector<9x128xf32>
    %48 = arith.addf %43, %47 : vector<9x128xf32>
    %49 = vector.extract_strided_slice %9 {offsets = [1, 0], sizes = [9, 128], strides = [1, 1]} : vector<11x128xbf16> to vector<9x128xbf16>
    %c3_37 = arith.constant 3 : index
    %c0_38 = arith.constant 0 : index
    %c0_39 = arith.constant 0 : index
    %50 = vector.load %arg4[%c3_37, %c0_38, %c0_39] : memref<9x128x128xbf16, #tpu.memory_space<vmem>>, vector<1x128x128xbf16>
    %51 = vector.shape_cast %50 : vector<1x128x128xbf16> to vector<128x128xbf16>
    %cst_40 = arith.constant dense<0.000000e+00> : vector<9x128xf32>
    %52 = tpu.matmul %49, %51, %cst_40 {dimension_numbers = #tpu.dot_dimension_numbers<[1], [0], [0], [1], [0, 0, 1, 1], [], []>} : vector<9x128xbf16>, vector<128x128xbf16>, vector<9x128xf32> -> vector<9x128xf32>
    %53 = arith.addf %48, %52 : vector<9x128xf32>
    %54 = vector.extract_strided_slice %17 {offsets = [1, 0], sizes = [9, 128], strides = [1, 1]} : vector<11x128xbf16> to vector<9x128xbf16>
    %c4 = arith.constant 4 : index
    %c0_41 = arith.constant 0 : index
    %c0_42 = arith.constant 0 : index
    %55 = vector.load %arg4[%c4, %c0_41, %c0_42] : memref<9x128x128xbf16, #tpu.memory_space<vmem>>, vector<1x128x128xbf16>
    %56 = vector.shape_cast %55 : vector<1x128x128xbf16> to vector<128x128xbf16>
    %cst_43 = arith.constant dense<0.000000e+00> : vector<9x128xf32>
    %57 = tpu.matmul %54, %56, %cst_43 {dimension_numbers = #tpu.dot_dimension_numbers<[1], [0], [0], [1], [0, 0, 1, 1], [], []>} : vector<9x128xbf16>, vector<128x128xbf16>, vector<9x128xf32> -> vector<9x128xf32>
    %58 = arith.addf %53, %57 : vector<9x128xf32>
    %59 = vector.extract_strided_slice %25 {offsets = [1, 0], sizes = [9, 128], strides = [1, 1]} : vector<11x128xbf16> to vector<9x128xbf16>
    %c5 = arith.constant 5 : index
    %c0_44 = arith.constant 0 : index
    %c0_45 = arith.constant 0 : index
    %60 = vector.load %arg4[%c5, %c0_44, %c0_45] : memref<9x128x128xbf16, #tpu.memory_space<vmem>>, vector<1x128x128xbf16>
    %61 = vector.shape_cast %60 : vector<1x128x128xbf16> to vector<128x128xbf16>
    %cst_46 = arith.constant dense<0.000000e+00> : vector<9x128xf32>
    %62 = tpu.matmul %59, %61, %cst_46 {dimension_numbers = #tpu.dot_dimension_numbers<[1], [0], [0], [1], [0, 0, 1, 1], [], []>} : vector<9x128xbf16>, vector<128x128xbf16>, vector<9x128xf32> -> vector<9x128xf32>
    %63 = arith.addf %58, %62 : vector<9x128xf32>
    %64 = vector.extract_strided_slice %9 {offsets = [2, 0], sizes = [9, 128], strides = [1, 1]} : vector<11x128xbf16> to vector<9x128xbf16>
    %c6 = arith.constant 6 : index
    %c0_47 = arith.constant 0 : index
    %c0_48 = arith.constant 0 : index
    %65 = vector.load %arg4[%c6, %c0_47, %c0_48] : memref<9x128x128xbf16, #tpu.memory_space<vmem>>, vector<1x128x128xbf16>
    %66 = vector.shape_cast %65 : vector<1x128x128xbf16> to vector<128x128xbf16>
    %cst_49 = arith.constant dense<0.000000e+00> : vector<9x128xf32>
    %67 = tpu.matmul %64, %66, %cst_49 {dimension_numbers = #tpu.dot_dimension_numbers<[1], [0], [0], [1], [0, 0, 1, 1], [], []>} : vector<9x128xbf16>, vector<128x128xbf16>, vector<9x128xf32> -> vector<9x128xf32>
    %68 = arith.addf %63, %67 : vector<9x128xf32>
    %69 = vector.extract_strided_slice %17 {offsets = [2, 0], sizes = [9, 128], strides = [1, 1]} : vector<11x128xbf16> to vector<9x128xbf16>
    %c7 = arith.constant 7 : index
    %c0_50 = arith.constant 0 : index
    %c0_51 = arith.constant 0 : index
    %70 = vector.load %arg4[%c7, %c0_50, %c0_51] : memref<9x128x128xbf16, #tpu.memory_space<vmem>>, vector<1x128x128xbf16>
    %71 = vector.shape_cast %70 : vector<1x128x128xbf16> to vector<128x128xbf16>
    %cst_52 = arith.constant dense<0.000000e+00> : vector<9x128xf32>
    %72 = tpu.matmul %69, %71, %cst_52 {dimension_numbers = #tpu.dot_dimension_numbers<[1], [0], [0], [1], [0, 0, 1, 1], [], []>} : vector<9x128xbf16>, vector<128x128xbf16>, vector<9x128xf32> -> vector<9x128xf32>
    %73 = arith.addf %68, %72 : vector<9x128xf32>
    %74 = vector.extract_strided_slice %25 {offsets = [2, 0], sizes = [9, 128], strides = [1, 1]} : vector<11x128xbf16> to vector<9x128xbf16>
    %c8 = arith.constant 8 : index
    %c0_53 = arith.constant 0 : index
    %c0_54 = arith.constant 0 : index
    %75 = vector.load %arg4[%c8, %c0_53, %c0_54] : memref<9x128x128xbf16, #tpu.memory_space<vmem>>, vector<1x128x128xbf16>
    %76 = vector.shape_cast %75 : vector<1x128x128xbf16> to vector<128x128xbf16>
    %cst_55 = arith.constant dense<0.000000e+00> : vector<9x128xf32>
    %77 = tpu.matmul %74, %76, %cst_55 {dimension_numbers = #tpu.dot_dimension_numbers<[1], [0], [0], [1], [0, 0, 1, 1], [], []>} : vector<9x128xbf16>, vector<128x128xbf16>, vector<9x128xf32> -> vector<9x128xf32>
    %78 = arith.addf %73, %77 : vector<9x128xf32>
    %79 = vector.broadcast %34 : vector<1x128xf32> to vector<9x128xf32>
    %80 = arith.addf %78, %79 : vector<9x128xf32>
    %cst_56 = arith.constant 0.000000e+00 : f32
    %81 = vector.broadcast %cst_56 : f32 to vector<9x128xf32>
    %82 = arith.maximumf %80, %81 : vector<9x128xf32>
    %83 = vector.extract_strided_slice %17 {offsets = [0, 0], sizes = [9, 128], strides = [1, 1]} : vector<11x128xbf16> to vector<9x128xbf16>
    %c0_57 = arith.constant 0 : index
    %c0_58 = arith.constant 0 : index
    %c0_59 = arith.constant 0 : index
    %84 = vector.load %arg4[%c0_57, %c0_58, %c0_59] : memref<9x128x128xbf16, #tpu.memory_space<vmem>>, vector<1x128x128xbf16>
    %85 = vector.shape_cast %84 : vector<1x128x128xbf16> to vector<128x128xbf16>
    %cst_60 = arith.constant dense<0.000000e+00> : vector<9x128xf32>
    %86 = tpu.matmul %83, %85, %cst_60 {dimension_numbers = #tpu.dot_dimension_numbers<[1], [0], [0], [1], [0, 0, 1, 1], [], []>} : vector<9x128xbf16>, vector<128x128xbf16>, vector<9x128xf32> -> vector<9x128xf32>
    %87 = vector.extract_strided_slice %25 {offsets = [0, 0], sizes = [9, 128], strides = [1, 1]} : vector<11x128xbf16> to vector<9x128xbf16>
    %c1_61 = arith.constant 1 : index
    %c0_62 = arith.constant 0 : index
    %c0_63 = arith.constant 0 : index
    %88 = vector.load %arg4[%c1_61, %c0_62, %c0_63] : memref<9x128x128xbf16, #tpu.memory_space<vmem>>, vector<1x128x128xbf16>
    %89 = vector.shape_cast %88 : vector<1x128x128xbf16> to vector<128x128xbf16>
    %cst_64 = arith.constant dense<0.000000e+00> : vector<9x128xf32>
    %90 = tpu.matmul %87, %89, %cst_64 {dimension_numbers = #tpu.dot_dimension_numbers<[1], [0], [0], [1], [0, 0, 1, 1], [], []>} : vector<9x128xbf16>, vector<128x128xbf16>, vector<9x128xf32> -> vector<9x128xf32>
    %91 = arith.addf %86, %90 : vector<9x128xf32>
    %92 = vector.extract_strided_slice %33 {offsets = [0, 0], sizes = [9, 128], strides = [1, 1]} : vector<11x128xbf16> to vector<9x128xbf16>
    %c2_65 = arith.constant 2 : index
    %c0_66 = arith.constant 0 : index
    %c0_67 = arith.constant 0 : index
    %93 = vector.load %arg4[%c2_65, %c0_66, %c0_67] : memref<9x128x128xbf16, #tpu.memory_space<vmem>>, vector<1x128x128xbf16>
    %94 = vector.shape_cast %93 : vector<1x128x128xbf16> to vector<128x128xbf16>
    %cst_68 = arith.constant dense<0.000000e+00> : vector<9x128xf32>
    %95 = tpu.matmul %92, %94, %cst_68 {dimension_numbers = #tpu.dot_dimension_numbers<[1], [0], [0], [1], [0, 0, 1, 1], [], []>} : vector<9x128xbf16>, vector<128x128xbf16>, vector<9x128xf32> -> vector<9x128xf32>
    %96 = arith.addf %91, %95 : vector<9x128xf32>
    %97 = vector.extract_strided_slice %17 {offsets = [1, 0], sizes = [9, 128], strides = [1, 1]} : vector<11x128xbf16> to vector<9x128xbf16>
    %c3_69 = arith.constant 3 : index
    %c0_70 = arith.constant 0 : index
    %c0_71 = arith.constant 0 : index
    %98 = vector.load %arg4[%c3_69, %c0_70, %c0_71] : memref<9x128x128xbf16, #tpu.memory_space<vmem>>, vector<1x128x128xbf16>
    %99 = vector.shape_cast %98 : vector<1x128x128xbf16> to vector<128x128xbf16>
    %cst_72 = arith.constant dense<0.000000e+00> : vector<9x128xf32>
    %100 = tpu.matmul %97, %99, %cst_72 {dimension_numbers = #tpu.dot_dimension_numbers<[1], [0], [0], [1], [0, 0, 1, 1], [], []>} : vector<9x128xbf16>, vector<128x128xbf16>, vector<9x128xf32> -> vector<9x128xf32>
    %101 = arith.addf %96, %100 : vector<9x128xf32>
    %102 = vector.extract_strided_slice %25 {offsets = [1, 0], sizes = [9, 128], strides = [1, 1]} : vector<11x128xbf16> to vector<9x128xbf16>
    %c4_73 = arith.constant 4 : index
    %c0_74 = arith.constant 0 : index
    %c0_75 = arith.constant 0 : index
    %103 = vector.load %arg4[%c4_73, %c0_74, %c0_75] : memref<9x128x128xbf16, #tpu.memory_space<vmem>>, vector<1x128x128xbf16>
    %104 = vector.shape_cast %103 : vector<1x128x128xbf16> to vector<128x128xbf16>
    %cst_76 = arith.constant dense<0.000000e+00> : vector<9x128xf32>
    %105 = tpu.matmul %102, %104, %cst_76 {dimension_numbers = #tpu.dot_dimension_numbers<[1], [0], [0], [1], [0, 0, 1, 1], [], []>} : vector<9x128xbf16>, vector<128x128xbf16>, vector<9x128xf32> -> vector<9x128xf32>
    %106 = arith.addf %101, %105 : vector<9x128xf32>
    %107 = vector.extract_strided_slice %33 {offsets = [1, 0], sizes = [9, 128], strides = [1, 1]} : vector<11x128xbf16> to vector<9x128xbf16>
    %c5_77 = arith.constant 5 : index
    %c0_78 = arith.constant 0 : index
    %c0_79 = arith.constant 0 : index
    %108 = vector.load %arg4[%c5_77, %c0_78, %c0_79] : memref<9x128x128xbf16, #tpu.memory_space<vmem>>, vector<1x128x128xbf16>
    %109 = vector.shape_cast %108 : vector<1x128x128xbf16> to vector<128x128xbf16>
    %cst_80 = arith.constant dense<0.000000e+00> : vector<9x128xf32>
    %110 = tpu.matmul %107, %109, %cst_80 {dimension_numbers = #tpu.dot_dimension_numbers<[1], [0], [0], [1], [0, 0, 1, 1], [], []>} : vector<9x128xbf16>, vector<128x128xbf16>, vector<9x128xf32> -> vector<9x128xf32>
    %111 = arith.addf %106, %110 : vector<9x128xf32>
    %112 = vector.extract_strided_slice %17 {offsets = [2, 0], sizes = [9, 128], strides = [1, 1]} : vector<11x128xbf16> to vector<9x128xbf16>
    %c6_81 = arith.constant 6 : index
    %c0_82 = arith.constant 0 : index
    %c0_83 = arith.constant 0 : index
    %113 = vector.load %arg4[%c6_81, %c0_82, %c0_83] : memref<9x128x128xbf16, #tpu.memory_space<vmem>>, vector<1x128x128xbf16>
    %114 = vector.shape_cast %113 : vector<1x128x128xbf16> to vector<128x128xbf16>
    %cst_84 = arith.constant dense<0.000000e+00> : vector<9x128xf32>
    %115 = tpu.matmul %112, %114, %cst_84 {dimension_numbers = #tpu.dot_dimension_numbers<[1], [0], [0], [1], [0, 0, 1, 1], [], []>} : vector<9x128xbf16>, vector<128x128xbf16>, vector<9x128xf32> -> vector<9x128xf32>
    %116 = arith.addf %111, %115 : vector<9x128xf32>
    %117 = vector.extract_strided_slice %25 {offsets = [2, 0], sizes = [9, 128], strides = [1, 1]} : vector<11x128xbf16> to vector<9x128xbf16>
    %c7_85 = arith.constant 7 : index
    %c0_86 = arith.constant 0 : index
    %c0_87 = arith.constant 0 : index
    %118 = vector.load %arg4[%c7_85, %c0_86, %c0_87] : memref<9x128x128xbf16, #tpu.memory_space<vmem>>, vector<1x128x128xbf16>
    %119 = vector.shape_cast %118 : vector<1x128x128xbf16> to vector<128x128xbf16>
    %cst_88 = arith.constant dense<0.000000e+00> : vector<9x128xf32>
    %120 = tpu.matmul %117, %119, %cst_88 {dimension_numbers = #tpu.dot_dimension_numbers<[1], [0], [0], [1], [0, 0, 1, 1], [], []>} : vector<9x128xbf16>, vector<128x128xbf16>, vector<9x128xf32> -> vector<9x128xf32>
    %121 = arith.addf %116, %120 : vector<9x128xf32>
    %122 = vector.extract_strided_slice %33 {offsets = [2, 0], sizes = [9, 128], strides = [1, 1]} : vector<11x128xbf16> to vector<9x128xbf16>
    %c8_89 = arith.constant 8 : index
    %c0_90 = arith.constant 0 : index
    %c0_91 = arith.constant 0 : index
    %123 = vector.load %arg4[%c8_89, %c0_90, %c0_91] : memref<9x128x128xbf16, #tpu.memory_space<vmem>>, vector<1x128x128xbf16>
    %124 = vector.shape_cast %123 : vector<1x128x128xbf16> to vector<128x128xbf16>
    %cst_92 = arith.constant dense<0.000000e+00> : vector<9x128xf32>
    %125 = tpu.matmul %122, %124, %cst_92 {dimension_numbers = #tpu.dot_dimension_numbers<[1], [0], [0], [1], [0, 0, 1, 1], [], []>} : vector<9x128xbf16>, vector<128x128xbf16>, vector<9x128xf32> -> vector<9x128xf32>
    %126 = arith.addf %121, %125 : vector<9x128xf32>
    %127 = vector.broadcast %34 : vector<1x128xf32> to vector<9x128xf32>
    %128 = arith.addf %126, %127 : vector<9x128xf32>
    %cst_93 = arith.constant 0.000000e+00 : f32
    %129 = vector.broadcast %cst_93 : f32 to vector<9x128xf32>
    %130 = arith.maximumf %128, %129 : vector<9x128xf32>
    %c0_94 = arith.constant 0 : index
    %c0_95 = arith.constant 0 : index
    %131 = vector.load %arg7[%c0_94, %c0_95] : memref<1x128xf32, #tpu.memory_space<vmem>>, vector<1x128xf32>
    %132 = arith.maximumf %82, %130 : vector<9x128xf32>
    %133 = vector.extract_strided_slice %132 {offsets = [0, 0], sizes = [1, 128], strides = [1, 1]} : vector<9x128xf32> to vector<1x128xf32>
    %134 = vector.extract_strided_slice %132 {offsets = [1, 0], sizes = [1, 128], strides = [1, 1]} : vector<9x128xf32> to vector<1x128xf32>
    %135 = arith.maximumf %133, %134 : vector<1x128xf32>
    %136 = arith.truncf %135 : vector<1x128xf32> to vector<1x128xbf16>
    %c0_96 = arith.constant 0 : index
    %c0_97 = arith.constant 0 : index
    %c0_98 = arith.constant 0 : index
    %137 = vector.load %arg6[%c0_96, %c0_97, %c0_98] : memref<4x128x128xbf16, #tpu.memory_space<vmem>>, vector<1x128x128xbf16>
    %138 = vector.shape_cast %137 : vector<1x128x128xbf16> to vector<128x128xbf16>
    %cst_99 = arith.constant dense<0.000000e+00> : vector<1x128xf32>
    %139 = tpu.matmul %136, %138, %cst_99 {dimension_numbers = #tpu.dot_dimension_numbers<[1], [0], [0], [1], [0, 0, 1, 1], [], []>} : vector<1x128xbf16>, vector<128x128xbf16>, vector<1x128xf32> -> vector<1x128xf32>
    %140 = arith.addf %131, %139 : vector<1x128xf32>
    %141 = vector.extract_strided_slice %132 {offsets = [2, 0], sizes = [1, 128], strides = [1, 1]} : vector<9x128xf32> to vector<1x128xf32>
    %142 = vector.extract_strided_slice %132 {offsets = [3, 0], sizes = [1, 128], strides = [1, 1]} : vector<9x128xf32> to vector<1x128xf32>
    %143 = arith.maximumf %141, %142 : vector<1x128xf32>
    %144 = arith.truncf %143 : vector<1x128xf32> to vector<1x128xbf16>
    %c1_100 = arith.constant 1 : index
    %c0_101 = arith.constant 0 : index
    %c0_102 = arith.constant 0 : index
    %145 = vector.load %arg6[%c1_100, %c0_101, %c0_102] : memref<4x128x128xbf16, #tpu.memory_space<vmem>>, vector<1x128x128xbf16>
    %146 = vector.shape_cast %145 : vector<1x128x128xbf16> to vector<128x128xbf16>
    %cst_103 = arith.constant dense<0.000000e+00> : vector<1x128xf32>
    %147 = tpu.matmul %144, %146, %cst_103 {dimension_numbers = #tpu.dot_dimension_numbers<[1], [0], [0], [1], [0, 0, 1, 1], [], []>} : vector<1x128xbf16>, vector<128x128xbf16>, vector<1x128xf32> -> vector<1x128xf32>
    %148 = arith.addf %140, %147 : vector<1x128xf32>
    %149 = vector.extract_strided_slice %132 {offsets = [4, 0], sizes = [1, 128], strides = [1, 1]} : vector<9x128xf32> to vector<1x128xf32>
    %150 = vector.extract_strided_slice %132 {offsets = [5, 0], sizes = [1, 128], strides = [1, 1]} : vector<9x128xf32> to vector<1x128xf32>
    %151 = arith.maximumf %149, %150 : vector<1x128xf32>
    %152 = arith.truncf %151 : vector<1x128xf32> to vector<1x128xbf16>
    %c2_104 = arith.constant 2 : index
    %c0_105 = arith.constant 0 : index
    %c0_106 = arith.constant 0 : index
    %153 = vector.load %arg6[%c2_104, %c0_105, %c0_106] : memref<4x128x128xbf16, #tpu.memory_space<vmem>>, vector<1x128x128xbf16>
    %154 = vector.shape_cast %153 : vector<1x128x128xbf16> to vector<128x128xbf16>
    %cst_107 = arith.constant dense<0.000000e+00> : vector<1x128xf32>
    %155 = tpu.matmul %152, %154, %cst_107 {dimension_numbers = #tpu.dot_dimension_numbers<[1], [0], [0], [1], [0, 0, 1, 1], [], []>} : vector<1x128xbf16>, vector<128x128xbf16>, vector<1x128xf32> -> vector<1x128xf32>
    %156 = arith.addf %148, %155 : vector<1x128xf32>
    %157 = vector.extract_strided_slice %132 {offsets = [6, 0], sizes = [1, 128], strides = [1, 1]} : vector<9x128xf32> to vector<1x128xf32>
    %158 = vector.extract_strided_slice %132 {offsets = [7, 0], sizes = [1, 128], strides = [1, 1]} : vector<9x128xf32> to vector<1x128xf32>
    %159 = arith.maximumf %157, %158 : vector<1x128xf32>
    %160 = arith.truncf %159 : vector<1x128xf32> to vector<1x128xbf16>
    %c3_108 = arith.constant 3 : index
    %c0_109 = arith.constant 0 : index
    %c0_110 = arith.constant 0 : index
    %161 = vector.load %arg6[%c3_108, %c0_109, %c0_110] : memref<4x128x128xbf16, #tpu.memory_space<vmem>>, vector<1x128x128xbf16>
    %162 = vector.shape_cast %161 : vector<1x128x128xbf16> to vector<128x128xbf16>
    %cst_111 = arith.constant dense<0.000000e+00> : vector<1x128xf32>
    %163 = tpu.matmul %160, %162, %cst_111 {dimension_numbers = #tpu.dot_dimension_numbers<[1], [0], [0], [1], [0, 0, 1, 1], [], []>} : vector<1x128xbf16>, vector<128x128xbf16>, vector<1x128xf32> -> vector<1x128xf32>
    %164 = arith.addf %156, %163 : vector<1x128xf32>
    %cst_112 = arith.constant 0.000000e+00 : f32
    %165 = vector.broadcast %cst_112 : f32 to vector<1x128xf32>
    %166 = arith.maximumf %164, %165 : vector<1x128xf32>
    %167 = arith.truncf %166 : vector<1x128xf32> to vector<1x128xbf16>
    %c0_113 = arith.constant 0 : index
    %c0_114 = arith.constant 0 : index
    %168 = vector.load %arg8[%c0_113, %c0_114] : memref<128x128xbf16, #tpu.memory_space<vmem>>, vector<128x128xbf16>
    %cst_115 = arith.constant dense<0.000000e+00> : vector<1x128xf32>
    %169 = tpu.matmul %167, %168, %cst_115 {dimension_numbers = #tpu.dot_dimension_numbers<[1], [0], [0], [1], [0, 0, 1, 1], [], []>} : vector<1x128xbf16>, vector<128x128xbf16>, vector<1x128xf32> -> vector<1x128xf32>
    %c0_116 = arith.constant 0 : index
    %c0_117 = arith.constant 0 : index
    %170 = vector.load %arg9[%c0_116, %c0_117] : memref<1x128xf32, #tpu.memory_space<vmem>>, vector<1x128xf32>
    %171 = arith.addf %169, %170 : vector<1x128xf32>
    %cst_118 = arith.constant 0.000000e+00 : f32
    %172 = vector.broadcast %cst_118 : f32 to vector<1x128xf32>
    %173 = arith.maximumf %171, %172 : vector<1x128xf32>
    %174 = arith.truncf %173 : vector<1x128xf32> to vector<1x128xbf16>
    %c0_119 = arith.constant 0 : index
    %c0_120 = arith.constant 0 : index
    %175 = vector.load %arg10[%c0_119, %c0_120] : memref<128x128xbf16, #tpu.memory_space<vmem>>, vector<128x128xbf16>
    %cst_121 = arith.constant dense<0.000000e+00> : vector<1x128xf32>
    %176 = tpu.matmul %174, %175, %cst_121 {dimension_numbers = #tpu.dot_dimension_numbers<[1], [0], [0], [1], [0, 0, 1, 1], [], []>} : vector<1x128xbf16>, vector<128x128xbf16>, vector<1x128xf32> -> vector<1x128xf32>
    %c0_122 = arith.constant 0 : index
    %c0_123 = arith.constant 0 : index
    %177 = vector.load %arg11[%c0_122, %c0_123] : memref<1x128xf32, #tpu.memory_space<vmem>>, vector<1x128xf32>
    %178 = arith.addf %176, %177 : vector<1x128xf32>
    %c0_124 = arith.constant 0 : index
    %c0_125 = arith.constant 0 : index
    %c0_126 = arith.constant 0 : index
    %179 = vector.load %arg12[%c0_124, %c0_125, %c0_126] : memref<1x1x128xf32, #tpu.memory_space<vmem>>, vector<1x1x128xf32>
    %180 = vector.shape_cast %179 : vector<1x1x128xf32> to vector<1x128xf32>
    %181 = vector.shape_cast %178 : vector<1x128xf32> to vector<1x1x128xf32>
    tpu.vector_store %arg12[%c0_124, %c0_125, %c0_126], %181 {strides = array<i32>} : memref<1x1x128xf32, #tpu.memory_space<vmem>>, vector<1x1x128xf32>,
    return
  }
  func.func @transform_0(%arg0: i32) -> (i32, i32, i32, i32) {
    %c0_i32 = arith.constant 0 : i32
    %c0_i32_0 = arith.constant 0 : i32
    %c0_i32_1 = arith.constant 0 : i32
    %c0_i32_2 = arith.constant 0 : i32
    return %arg0, %c0_i32, %c0_i32_0, %c0_i32_1 : i32, i32, i32, i32
  }
  func.func @transform_1(%arg0: i32) -> (i32, i32) {
    %c0_i32 = arith.constant 0 : i32
    %c0_i32_0 = arith.constant 0 : i32
    %c0_i32_1 = arith.constant 0 : i32
    return %c0_i32, %c0_i32_0 : i32, i32
  }
  func.func @transform_2(%arg0: i32) -> (i32, i32) {
    %c0_i32 = arith.constant 0 : i32
    %c0_i32_0 = arith.constant 0 : i32
    %c0_i32_1 = arith.constant 0 : i32
    return %c0_i32, %c0_i32_0 : i32, i32
  }
  func.func @transform_3(%arg0: i32) -> (i32, i32, i32) {
    %c0_i32 = arith.constant 0 : i32
    %c0_i32_0 = arith.constant 0 : i32
    %c0_i32_1 = arith.constant 0 : i32
    %c0_i32_2 = arith.constant 0 : i32
    return %c0_i32, %c0_i32_0, %c0_i32_1 : i32, i32, i32
  }
  func.func @transform_4(%arg0: i32) -> (i32, i32) {
    %c0_i32 = arith.constant 0 : i32
    %c0_i32_0 = arith.constant 0 : i32
    %c0_i32_1 = arith.constant 0 : i32
    return %c0_i32, %c0_i32_0 : i32, i32
  }
  func.func @transform_5(%arg0: i32) -> (i32, i32, i32) {
    %c0_i32 = arith.constant 0 : i32
    %c0_i32_0 = arith.constant 0 : i32
    %c0_i32_1 = arith.constant 0 : i32
    %c0_i32_2 = arith.constant 0 : i32
    return %c0_i32, %c0_i32_0, %c0_i32_1 : i32, i32, i32
  }
  func.func @transform_6(%arg0: i32) -> (i32, i32) {
    %c0_i32 = arith.constant 0 : i32
    %c0_i32_0 = arith.constant 0 : i32
    %c0_i32_1 = arith.constant 0 : i32
    return %c0_i32, %c0_i32_0 : i32, i32
  }
  func.func @transform_7(%arg0: i32) -> (i32, i32) {
    %c0_i32 = arith.constant 0 : i32
    %c0_i32_0 = arith.constant 0 : i32
    %c0_i32_1 = arith.constant 0 : i32
    return %c0_i32, %c0_i32_0 : i32, i32
  }
  func.func @transform_8(%arg0: i32) -> (i32, i32) {
    %c0_i32 = arith.constant 0 : i32
    %c0_i32_0 = arith.constant 0 : i32
    %c0_i32_1 = arith.constant 0 : i32
    return %c0_i32, %c0_i32_0 : i32, i32
  }
  func.func @transform_9(%arg0: i32) -> (i32, i32) {
    %c0_i32 = arith.constant 0 : i32
    %c0_i32_0 = arith.constant 0 : i32
    %c0_i32_1 = arith.constant 0 : i32
    return %c0_i32, %c0_i32_0 : i32, i32
  }
  func.func @transform_10(%arg0: i32) -> (i32, i32) {
    %c0_i32 = arith.constant 0 : i32
    %c0_i32_0 = arith.constant 0 : i32
    %c0_i32_1 = arith.constant 0 : i32
    return %c0_i32, %c0_i32_0 : i32, i32
  }
  func.func @transform_11(%arg0: i32) -> (i32, i32, i32) {
    %c0_i32 = arith.constant 0 : i32
    %c0_i32_0 = arith.constant 0 : i32
    %c0_i32_1 = arith.constant 0 : i32
    return %arg0, %c0_i32, %c0_i32_0 : i32, i32, i32
  }
}

</mosaic_0001>

<llo_original>
// kernel: convnet_forward.1
$region0: #{convnet_forward.1}
  #allocation0 [shape = 'u32[]', space=smem, size = 0x4, offset = 0x4, fixed_abs, tag = 'smem constant byte address 0x4 - core index']
  #allocation1 [shape = 'u32[144,128]{1,0:T(1,128)}', space=vmem, size = 0x12000, scoped, tag = 'internal scratch']
  %s0 = inlined_call_operand.vmem [shape: bf16[2,4,11,16], index: 0, kind: input, shape index: {}]
  %s1 = inlined_call_operand.vmem [shape: bf16[16,128], index: 1, kind: input, shape index: {}]
  %s2 = inlined_call_operand.vmem [shape: f32[1,128], index: 2, kind: input, shape index: {}]
  %s3 = inlined_call_operand.vmem [shape: bf16[9,128,128], index: 3, kind: input, shape index: {}]
  %s4 = inlined_call_operand.vmem [shape: f32[1,128], index: 4, kind: input, shape index: {}]
  %s5 = inlined_call_operand.vmem [shape: bf16[4,128,128], index: 5, kind: input, shape index: {}]
  %s6 = inlined_call_operand.vmem [shape: f32[1,128], index: 6, kind: input, shape index: {}]
  %s7 = inlined_call_operand.vmem [shape: bf16[128,128], index: 7, kind: input, shape index: {}]
  %s8 = inlined_call_operand.vmem [shape: f32[1,128], index: 8, kind: input, shape index: {}]
  %s9 = inlined_call_operand.vmem [shape: bf16[128,128], index: 9, kind: input, shape index: {}]
  %s10 = inlined_call_operand.vmem [shape: f32[1,128], index: 10, kind: input, shape index: {}]
  %s11 = inlined_call_operand.hbm [shape: f32[2,1,128], index: 11, kind: output, shape index: {}]
  %s12 = sld [smem:[#allocation0]]
  $region77: #{convnet_forward.1} parent=0
    _
  %s14 = ssub.s32 1, %s12
  %s15 = scalar_select 0, %s14, %s12
  $region1: #{convnet_forward.1} parent=0
    #allocation2 [shape = 'u8[1024]{0}', space=vmem, size = 0x400, scoped, tag = 'output window, operand 0']
    #allocation3 [shape = 's32[2]{0}', space=sflag, size = 0x8, scoped, tag = 'scoped memory for convnet_forward.1']
    %16 = vsyncpa [#allocation3], 0
    %s17 = scalar_lea.sflag [#allocation3], 1
    %18 = vsyncpa %s17, 0
    loop: start=0, step=1, limit=4
    $region2: #{convnet_forward.1} parent=1 // loop_pre_header
      _
    $region3: #{convnet_forward.1} parent=1 // loop_header
      %s20 = sphi 0, %s24
      %p21 = scmp.ge.s32.totalorder %s20, 4
      %s30 = sphi 0, %s32
      %s33 = sphi 0, %s30
      %s34 = sphi 0, %s33
      %s50 = sphi 0, %s34
      %s54 = sphi 0, %s54
      %s56 = sphi 0, %s54
      %s57 = sphi 0, %s56
      %s71 = sphi 0, %s57
      %s75 = sphi 0, %s75
      %s77 = sphi 0, %s75
      %s78 = sphi 0, %s77
      %s92 = sphi 0, %s78
      %s96 = sphi 0, %s96
      %s98 = sphi 0, %s96
      %s99 = sphi 0, %s98
      %s113 = sphi 0, %s99
      %s117 = sphi 0, %s117
      %s119 = sphi 0, %s117
      %s120 = sphi 0, %s119
      %s134 = sphi 0, %s120
      %s138 = sphi 0, %s138
      %s140 = sphi 0, %s138
      %s141 = sphi 0, %s140
      %s155 = sphi 0, %s141
      %s159 = sphi 0, %s159
      %s161 = sphi 0, %s159
      %s162 = sphi 0, %s161
      %s176 = sphi 0, %s162
      %s180 = sphi 0, %s180
      %s182 = sphi 0, %s180
      %s183 = sphi 0, %s182
      %s197 = sphi 0, %s183
      %s201 = sphi 0, %s201
      %s203 = sphi 0, %s201
      %s204 = sphi 0, %s203
      %s218 = sphi 0, %s204
      %s222 = sphi 0, %s222
      %s224 = sphi 0, %s222
      %s225 = sphi 0, %s224
      %s239 = sphi 0, %s225
      %s243 = sphi 0, %s243
      %s245 = sphi 0, %s243
      %s246 = sphi 0, %s245
      %s260 = sphi 0, %s246
      %s266 = sphi 0, %s268
      %s269 = sphi 0, %s266
      %s270 = sphi 0, %s269
      %s286 = sphi 0, %s270
    $region4: #{convnet_forward.1} parent=1 // loop_header_branch
      %23 = sbr.rel (%p21) target = $region8
    $region5: #{convnet_forward.1} parent=1 // loop_body
      %s25 = ssub.s32 %s20, 1
      %s26 = ssub.s32 %s20, 2
      %s27 = sadd.s32 %s20, 1
      %s28 = ssub.s32 %s20, %s27
      %p29 = scmp.eq.s32.totalorder %s28, 0
      %s31 = sadd.s32 %s30, 1
      %s32 = scalar_select %p29, %s30, %s31
      %p35 = pneg %p29
      %p36 = scmp.eq.s32.totalorder %s20, 1
      %p37 = por %p35, %p36
      %p38 = scmp.ne.s32.totalorder %s30, %s33
      %p39 = scmp.eq.s32.totalorder %s20, 0
      %p40 = por %p38, %p39
      %p41 = scmp.ne.s32.totalorder %s30, %s33
      %p42 = scmp.eq.s32.totalorder %s25, 1
      %p43 = por %p41, %p42
      %p44 = scmp.ne.s32.totalorder %s33, %s34
      %p45 = scmp.eq.s32.totalorder %s25, 0
      %p46 = por %p44, %p45
      %p47 = scmp.ne.s32.totalorder %s33, %s34
      %p48 = scmp.eq.s32.totalorder %s26, 1
      %p49 = por %p47, %p48
      %p51 = scmp.ne.s32.totalorder %s34, %s50
      %p52 = scmp.eq.s32.totalorder %s26, 0
      %p53 = por %p51, %p52
      %s55 = sadd.s32 %s54, 1
      %p58 = scmp.eq.s32.totalorder %s20, 1
      %p59 = scmp.ne.s32.totalorder %s54, %s56
      %p60 = scmp.eq.s32.totalorder %s20, 0
      %p61 = por %p59, %p60
      %p62 = scmp.ne.s32.totalorder %s54, %s56
      %p63 = scmp.eq.s32.totalorder %s25, 1
      %p64 = por %p62, %p63
      %p65 = scmp.ne.s32.totalorder %s56, %s57
      %p66 = scmp.eq.s32.totalorder %s25, 0
      %p67 = por %p65, %p66
      %p68 = scmp.ne.s32.totalorder %s56, %s57
      %p69 = scmp.eq.s32.totalorder %s26, 1
      %p70 = por %p68, %p69
      %p72 = scmp.ne.s32.totalorder %s57, %s71
      %p73 = scmp.eq.s32.totalorder %s26, 0
      %p74 = por %p72, %p73
      %s76 = sadd.s32 %s75, 1
      %p79 = scmp.eq.s32.totalorder %s20, 1
      %p80 = scmp.ne.s32.totalorder %s75, %s77
      %p81 = scmp.eq.s32.totalorder %s20, 0
      %p82 = por %p80, %p81
      %p83 = scmp.ne.s32.totalorder %s75, %s77
      %p84 = scmp.eq.s32.totalorder %s25, 1
      %p85 = por %p83, %p84
      %p86 = scmp.ne.s32.totalorder %s77, %s78
      %p87 = scmp.eq.s32.totalorder %s25, 0
      %p88 = por %p86, %p87
      %p89 = scmp.ne.s32.totalorder %s77, %s78
      %p90 = scmp.eq.s32.totalorder %s26, 1
      %p91 = por %p89, %p90
      %p93 = scmp.ne.s32.totalorder %s78, %s92
      %p94 = scmp.eq.s32.totalorder %s26, 0
      %p95 = por %p93, %p94
      %s97 = sadd.s32 %s96, 1
      %p100 = scmp.eq.s32.totalorder %s20, 1
      %p101 = scmp.ne.s32.totalorder %s96, %s98
      %p102 = scmp.eq.s32.totalorder %s20, 0
      %p103 = por %p101, %p102
      %p104 = scmp.ne.s32.totalorder %s96, %s98
      %p105 = scmp.eq.s32.totalorder %s25, 1
      %p106 = por %p104, %p105
      %p107 = scmp.ne.s32.totalorder %s98, %s99
      %p108 = scmp.eq.s32.totalorder %s25, 0
      %p109 = por %p107, %p108
      %p110 = scmp.ne.s32.totalorder %s98, %s99
      %p111 = scmp.eq.s32.totalorder %s26, 1
      %p112 = por %p110, %p111
      %p114 = scmp.ne.s32.totalorder %s99, %s113
      %p115 = scmp.eq.s32.totalorder %s26, 0
      %p116 = por %p114, %p115
      %s118 = sadd.s32 %s117, 1
      %p121 = scmp.eq.s32.totalorder %s20, 1
      %p122 = scmp.ne.s32.totalorder %s117, %s119
      %p123 = scmp.eq.s32.totalorder %s20, 0
      %p124 = por %p122, %p123
      %p125 = scmp.ne.s32.totalorder %s117, %s119
      %p126 = scmp.eq.s32.totalorder %s25, 1
      %p127 = por %p125, %p126
      %p128 = scmp.ne.s32.totalorder %s119, %s120
      %p129 = scmp.eq.s32.totalorder %s25, 0
      %p130 = por %p128, %p129
      %p131 = scmp.ne.s32.totalorder %s119, %s120
      %p132 = scmp.eq.s32.totalorder %s26, 1
      %p133 = por %p131, %p132
      %p135 = scmp.ne.s32.totalorder %s120, %s134
      %p136 = scmp.eq.s32.totalorder %s26, 0
      %p137 = por %p135, %p136
      %s139 = sadd.s32 %s138, 1
      %p142 = scmp.eq.s32.totalorder %s20, 1
      %p143 = scmp.ne.s32.totalorder %s138, %s140
      %p144 = scmp.eq.s32.totalorder %s20, 0
      %p145 = por %p143, %p144
      %p146 = scmp.ne.s32.totalorder %s138, %s140
      %p147 = scmp.eq.s32.totalorder %s25, 1
      %p148 = por %p146, %p147
      %p149 = scmp.ne.s32.totalorder %s140, %s141
      %p150 = scmp.eq.s32.totalorder %s25, 0
      %p151 = por %p149, %p150
      %p152 = scmp.ne.s32.totalorder %s140, %s141
      %p153 = scmp.eq.s32.totalorder %s26, 1
      %p154 = por %p152, %p153
      %p156 = scmp.ne.s32.totalorder %s141, %s155
      %p157 = scmp.eq.s32.totalorder %s26, 0
      %p158 = por %p156, %p157
      %s160 = sadd.s32 %s159, 1
      %p163 = scmp.eq.s32.totalorder %s20, 1
      %p164 = scmp.ne.s32.totalorder %s159, %s161
      %p165 = scmp.eq.s32.totalorder %s20, 0
      %p166 = por %p164, %p165
      %p167 = scmp.ne.s32.totalorder %s159, %s161
      %p168 = scmp.eq.s32.totalorder %s25, 1
      %p169 = por %p167, %p168
      %p170 = scmp.ne.s32.totalorder %s161, %s162
      %p171 = scmp.eq.s32.totalorder %s25, 0
      %p172 = por %p170, %p171
      %p173 = scmp.ne.s32.totalorder %s161, %s162
      %p174 = scmp.eq.s32.totalorder %s26, 1
      %p175 = por %p173, %p174
      %p177 = scmp.ne.s32.totalorder %s162, %s176
      %p178 = scmp.eq.s32.totalorder %s26, 0
      %p179 = por %p177, %p178
      %s181 = sadd.s32 %s180, 1
      %p184 = scmp.eq.s32.totalorder %s20, 1
      %p185 = scmp.ne.s32.totalorder %s180, %s182
      %p186 = scmp.eq.s32.totalorder %s20, 0
      %p187 = por %p185, %p186
      %p188 = scmp.ne.s32.totalorder %s180, %s182
      %p189 = scmp.eq.s32.totalorder %s25, 1
      %p190 = por %p188, %p189
      %p191 = scmp.ne.s32.totalorder %s182, %s183
      %p192 = scmp.eq.s32.totalorder %s25, 0
      %p193 = por %p191, %p192
      %p194 = scmp.ne.s32.totalorder %s182, %s183
      %p195 = scmp.eq.s32.totalorder %s26, 1
      %p196 = por %p194, %p195
      %p198 = scmp.ne.s32.totalorder %s183, %s197
      %p199 = scmp.eq.s32.totalorder %s26, 0
      %p200 = por %p198, %p199
      %s202 = sadd.s32 %s201, 1
      %p205 = scmp.eq.s32.totalorder %s20, 1
      %p206 = scmp.ne.s32.totalorder %s201, %s203
      %p207 = scmp.eq.s32.totalorder %s20, 0
      %p208 = por %p206, %p207
      %p209 = scmp.ne.s32.totalorder %s201, %s203
      %p210 = scmp.eq.s32.totalorder %s25, 1
      %p211 = por %p209, %p210
      %p212 = scmp.ne.s32.totalorder %s203, %s204
      %p213 = scmp.eq.s32.totalorder %s25, 0
      %p214 = por %p212, %p213
      %p215 = scmp.ne.s32.totalorder %s203, %s204
      %p216 = scmp.eq.s32.totalorder %s26, 1
      %p217 = por %p215, %p216
      %p219 = scmp.ne.s32.totalorder %s204, %s218
      %p220 = scmp.eq.s32.totalorder %s26, 0
      %p221 = por %p219, %p220
      %s223 = sadd.s32 %s222, 1
      %p226 = scmp.eq.s32.totalorder %s20, 1
      %p227 = scmp.ne.s32.totalorder %s222, %s224
      %p228 = scmp.eq.s32.totalorder %s20, 0
      %p229 = por %p227, %p228
      %p230 = scmp.ne.s32.totalorder %s222, %s224
      %p231 = scmp.eq.s32.totalorder %s25, 1
      %p232 = por %p230, %p231
      %p233 = scmp.ne.s32.totalorder %s224, %s225
      %p234 = scmp.eq.s32.totalorder %s25, 0
      %p235 = por %p233, %p234
      %p236 = scmp.ne.s32.totalorder %s224, %s225
      %p237 = scmp.eq.s32.totalorder %s26, 1
      %p238 = por %p236, %p237
      %p240 = scmp.ne.s32.totalorder %s225, %s239
      %p241 = scmp.eq.s32.totalorder %s26, 0
      %p242 = por %p240, %p241
      %s244 = sadd.s32 %s243, 1
      %p247 = scmp.eq.s32.totalorder %s20, 1
      %p248 = scmp.ne.s32.totalorder %s243, %s245
      %p249 = scmp.eq.s32.totalorder %s20, 0
      %p250 = por %p248, %p249
      %p251 = scmp.ne.s32.totalorder %s243, %s245
      %p252 = scmp.eq.s32.totalorder %s25, 1
      %p253 = por %p251, %p252
      %p254 = scmp.ne.s32.totalorder %s245, %s246
      %p255 = scmp.eq.s32.totalorder %s25, 0
      %p256 = por %p254, %p255
      %p257 = scmp.ne.s32.totalorder %s245, %s246
      %p258 = scmp.eq.s32.totalorder %s26, 1
      %p259 = por %p257, %p258
      %p261 = scmp.ne.s32.totalorder %s246, %s260
      %p262 = scmp.eq.s32.totalorder %s26, 0
      %p263 = por %p261, %p262
      %s264 = ssub.s32 %s20, %s27
      %p265 = scmp.eq.s32.totalorder %s264, 0
      %s267 = sadd.s32 %s266, 1
      %s268 = scalar_select %p265, %s266, %s267
      %p271 = pneg %p265
      %p272 = scmp.eq.s32.totalorder %s20, 1
      %p273 = por %p271, %p272
      %p274 = scmp.ne.s32.totalorder %s266, %s269
      %p275 = scmp.eq.s32.totalorder %s20, 0
      %p276 = por %p274, %p275
      %p277 = scmp.ne.s32.totalorder %s266, %s269
      %p278 = scmp.eq.s32.totalorder %s25, 1
      %p279 = por %p277, %p278
      %p280 = scmp.ne.s32.totalorder %s269, %s270
      %p281 = scmp.eq.s32.totalorder %s25, 0
      %p282 = por %p280, %p281
      %p283 = scmp.ne.s32.totalorder %s269, %s270
      %p284 = scmp.eq.s32.totalorder %s26, 1
      %p285 = por %p283, %p284
      %p287 = scmp.ne.s32.totalorder %s270, %s286
      %p288 = scmp.eq.s32.totalorder %s26, 0
      %p289 = por %p287, %p288
      %p290 = scmp.le.s32.totalorder 1, %s20
      %p291 = scmp.lt.s32.totalorder %s20, 3
      %p292 = pnand %p290, %p291
      %p293 = pneg %p292
      // Predicated region
      $region9: #{convnet_forward.1} parent=5 // pred_check
        _
      $region10: #{convnet_forward.1} parent=5 // pred_check_branch
        %295 = sbr.rel (%p292) target = $region12
      $region11: #{convnet_forward.1} parent=5 // pred_region
        %s296 = ssub.s32 %s20, 1
        // Predicated region
        $region13: #{convnet_forward.1} parent=11 // pred_check
          %p297 = pneg %p67
        $region14: #{convnet_forward.1} parent=11 // pred_check_branch
          %299 = sbr.rel (%p297) target = $region16
        $region15: #{convnet_forward.1} parent=11 // pred_region
          _
        $region16: #{convnet_forward.1} parent=11 // pred_fallthru
          _
        // Predicated region
        $region17: #{convnet_forward.1} parent=11 // pred_check
          %p300 = pneg %p88
        $region18: #{convnet_forward.1} parent=11 // pred_check_branch
          %302 = sbr.rel (%p300) target = $region20
        $region19: #{convnet_forward.1} parent=11 // pred_region
          _
        $region20: #{convnet_forward.1} parent=11 // pred_fallthru
          _
        // Predicated region
        $region21: #{convnet_forward.1} parent=11 // pred_check
          %p303 = pneg %p109
        $region22: #{convnet_forward.1} parent=11 // pred_check_branch
          %305 = sbr.rel (%p303) target = $region24
        $region23: #{convnet_forward.1} parent=11 // pred_region
          _
        $region24: #{convnet_forward.1} parent=11 // pred_fallthru
          _
        // Predicated region
        $region25: #{convnet_forward.1} parent=11 // pred_check
          %p306 = pneg %p130
        $region26: #{convnet_forward.1} parent=11 // pred_check_branch
          %308 = sbr.rel (%p306) target = $region28
        $region27: #{convnet_forward.1} parent=11 // pred_region
          _
        $region28: #{convnet_forward.1} parent=11 // pred_fallthru
          _
        // Predicated region
        $region29: #{convnet_forward.1} parent=11 // pred_check
          %p309 = pneg %p151
        $region30: #{convnet_forward.1} parent=11 // pred_check_branch
          %311 = sbr.rel (%p309) target = $region32
        $region31: #{convnet_forward.1} parent=11 // pred_region
          _
        $region32: #{convnet_forward.1} parent=11 // pred_fallthru
          _
        // Predicated region
        $region33: #{convnet_forward.1} parent=11 // pred_check
          %p312 = pneg %p172
        $region34: #{convnet_forward.1} parent=11 // pred_check_branch
          %314 = sbr.rel (%p312) target = $region36
        $region35: #{convnet_forward.1} parent=11 // pred_region
          _
        $region36: #{convnet_forward.1} parent=11 // pred_fallthru
          _
        // Predicated region
        $region37: #{convnet_forward.1} parent=11 // pred_check
          %p315 = pneg %p193
        $region38: #{convnet_forward.1} parent=11 // pred_check_branch
          %317 = sbr.rel (%p315) target = $region40
        $region39: #{convnet_forward.1} parent=11 // pred_region
          _
        $region40: #{convnet_forward.1} parent=11 // pred_fallthru
          _
        // Predicated region
        $region41: #{convnet_forward.1} parent=11 // pred_check
          %p318 = pneg %p214
        $region42: #{convnet_forward.1} parent=11 // pred_check_branch
          %320 = sbr.rel (%p318) target = $region44
        $region43: #{convnet_forward.1} parent=11 // pred_region
          _
        $region44: #{convnet_forward.1} parent=11 // pred_fallthru
          _
        // Predicated region
        $region45: #{convnet_forward.1} parent=11 // pred_check
          %p321 = pneg %p235
        $region46: #{convnet_forward.1} parent=11 // pred_check_branch
          %323 = sbr.rel (%p321) target = $region48
        $region47: #{convnet_forward.1} parent=11 // pred_region
          _
        $region48: #{convnet_forward.1} parent=11 // pred_fallthru
          _
        // Predicated region
        $region49: #{convnet_forward.1} parent=11 // pred_check
          %p324 = pneg %p256
        $region50: #{convnet_forward.1} parent=11 // pred_check_branch
          %326 = sbr.rel (%p324) target = $region52
        $region51: #{convnet_forward.1} parent=11 // pred_region
          _
        $region52: #{convnet_forward.1} parent=11 // pred_fallthru
          _
      $region12: #{convnet_forward.1} parent=5 // pred_fallthru
        _
      %p327 = scmp.lt.s32.totalorder %s20, 2
      // Predicated region
      $region53: #{convnet_forward.1} parent=5 // pred_check
        %p328 = pneg %p327
      $region54: #{convnet_forward.1} parent=5 // pred_check_branch
        %330 = sbr.rel (%p328) target = $region56
      $region55: #{convnet_forward.1} parent=5 // pred_region
        // Predicated region
        $region57: #{convnet_forward.1} parent=55 // pred_check
          %p331 = pneg %p40
        $region58: #{convnet_forward.1} parent=55 // pred_check_branch
          %333 = sbr.rel (%p331) target = $region60
        $region59: #{convnet_forward.1} parent=55 // pred_region
          %p334 = scmp.lt.s32.totalorder %s20, 1
          %s335 = scalar_select %p334, %s20, 1
          %s336 = smul.addr %s335, 8
          %s337 = smul.addr %s336, 4
          %s338 = scalar_lea.vmem %s0, %s337
        $region60: #{convnet_forward.1} parent=55 // pred_fallthru
          _
      $region56: #{convnet_forward.1} parent=5 // pred_fallthru
        _
      %p339 = scmp.le.s32.totalorder 1, %s20
      %p340 = scmp.lt.s32.totalorder %s20, 3
      %p341 = pnand %p339, %p340
      %p342 = pneg %p341
      // Predicated region
      $region61: #{convnet_forward.1} parent=5 // pred_check
        _
      $region62: #{convnet_forward.1} parent=5 // pred_check_branch
        %344 = sbr.rel (%p341) target = $region64
      $region63: #{convnet_forward.1} parent=5 // pred_region
        %s345 = ssub.s32 %s20, 1
        %p346 = scmp.lt.s32.totalorder %s25, 1
        %s347 = scalar_select %p346, %s25, 1
        %s348 = smul.addr %s347, 8
        %s349 = smul.addr %s348, 4
        %s350 = scalar_lea.vmem %s0, %s349
        %p351 = pneg %p46
        %p352 = pneg %p43
        %p353 = pneg %p67
        %p354 = pneg %p64
        %p355 = pneg %p88
        %p356 = pneg %p85
        %p357 = pneg %p109
        %p358 = pneg %p106
        %p359 = pneg %p130
        %p360 = pneg %p127
        %p361 = pneg %p151
        %p362 = pneg %p148
        %p363 = pneg %p172
        %p364 = pneg %p169
        %p365 = pneg %p193
        %p366 = pneg %p190
        %p367 = pneg %p214
        %p368 = pneg %p211
        %p369 = pneg %p235
        %p370 = pneg %p232
        %p371 = pneg %p256
        %p372 = pneg %p253
        %p373 = pneg %p282
        %p374 = pneg %p279
        %s375 = sand.u32 %s269, 1
        %s376 = scalar_lea.sflag [#allocation3], %s375
        %s377 = sand.u32 %s269, 1
        %s378 = scalar_lea.vmem [#allocation2], %s377
        %p379 = scmp.lt.s32.totalorder %s25, 1
        %s380 = scalar_select %p379, %s25, 1
        %s381 = smul.addr %s380, 8
        %s382 = smul.addr %s381, 4
        %s383 = scalar_lea.vmem %s0, %s382
        %v385 = vld [vmem:[%s1] sm:$0xf]
        %v386 = vld [vmem:[%s1 + $0x4] sm:$0xf]
        %v387 = vld [vmem:[%s2] sm:$0x1]
        %v388 = vld [vmem:[%s383] sm:$0xf]
        %v389 = vld [vmem:[%s383 + $0x4] sm:$0x3]
        %v391 = vlaneseq
        %v392 = vshrl.u32 %v391, 7
        %v393 = vsub.s32 0, %v392
        %v394 = vrot.slane %v387, %v393
        %v398 = vunpack.c.l.b16 %v388
        %v399 = vunpack.c.l.b16 %v389
        %v400 = vpack.c.b16 %v399, %v398
        %v403 = vunpack.c.l.b16 %v385
        %v404 = vunpack.c.l.b16 %v386
        %v405 = vpack.c.b16 %v404, %v403
        %vm407 = vcmask 130048
        %v409 = vsel %vm407, %v400, 0
        %411 = vmatprep.subr.bf16.mxu0 0
        %412 = vmatpush1.bf16.msra.mxu0 0
        %413 = vmatprep.subr.bf16.mxu0 0
        %414 = vmatpush1.bf16.msra.mxu0 0
        %415 = vmatprep.subr.bf16.mxu0 0
        %416 = vmatpush1.bf16.msra.mxu0 0
        %417 = vmatprep.subr.bf16.mxu0 0
        %418 = vmatpush1.bf16.msra.mxu0 0
        %419 = vmatprep.subr.bf16.mxu0 0
        %420 = vmatpush1.bf16.msra.mxu0 0
        %421 = vmatprep.subr.bf16.mxu0 0
        %422 = vmatpush1.bf16.msra.mxu0 0
        %423 = vmatprep.subr.bf16.mxu0 0
        %424 = vmatpush1.bf16.msra.mxu0 0
        %425 = vmatprep.subr.bf16.mxu0 0
        %426 = vmatpush1.bf16.msra.mxu0 %v405
        %427 = vmatprep.subr.bf16.mxu0 0
        %428 = vmatpush2.bf16.msra.mxu0 0
        %429 = vmatprep.subr.bf16.mxu0 0
        %430 = vmatpush2.bf16.msra.mxu0 0
        %431 = vmatprep.subr.bf16.mxu0 0
        %432 = vmatpush2.bf16.msra.mxu0 0
        %433 = vmatprep.subr.bf16.mxu0 0
        %434 = vmatpush2.bf16.msra.mxu0 0
        %435 = vmatprep.subr.bf16.mxu0 0
        %436 = vmatpush2.bf16.msra.mxu0 0
        %437 = vmatprep.subr.bf16.mxu0 0
        %438 = vmatpush2.bf16.msra.mxu0 0
        %439 = vmatprep.subr.bf16.mxu0 0
        %440 = vmatpush2.bf16.msra.mxu0 0
        %441 = vmatprep.subr.bf16.mxu0 0
        %442 = vmatpush2.bf16.msra.mxu0 0
        %443 = vmatprep.mubr.bf16.mxu0 0
        %444 = vmatmul.mubr.bf16.gmra.mxu0 %v409
        %v445 = vpop.f32.mrf.mxu0
        %v446 = vadd.f32 %v394, %v445
        %v447 = vpop.f32.mrf.mxu0
        %v448 = vpop.f32.mrf.mxu0
        %v449 = vadd.f32 %v394, %v448
        %v450 = vpop.f32.mrf.mxu0
        %451 = vdwg.mxu0
        %v452 = vmax.f32 %v446, 0.0
        %v453 = vmax.f32 %v449, 0.0
        %v454 = vpack.c.bf16 %v453, %v452
        %s455 = scalar_lea.vmem %s383, 8
        %v456 = vld [vmem:[%s455] sm:$0xf]
        %v457 = vld [vmem:[%s455 + $0x4] sm:$0x3]
        %v460 = vunpack.c.l.b16 %v456
        %v461 = vunpack.c.l.b16 %v457
        %v462 = vpack.c.b16 %v461, %v460
        %v464 = vsel %vm407, %v462, 0
        %466 = vmatprep.subr.bf16.mxu0 0
        %467 = vmatpush1.bf16.msra.mxu0 0
        %468 = vmatprep.subr.bf16.mxu0 0
        %469 = vmatpush1.bf16.msra.mxu0 0
        %470 = vmatprep.subr.bf16.mxu0 0
        %471 = vmatpush1.bf16.msra.mxu0 0
        %472 = vmatprep.subr.bf16.mxu0 0
        %473 = vmatpush1.bf16.msra.mxu0 0
        %474 = vmatprep.subr.bf16.mxu0 0
        %475 = vmatpush1.bf16.msra.mxu0 0
        %476 = vmatprep.subr.bf16.mxu0 0
        %477 = vmatpush1.bf16.msra.mxu0 0
        %478 = vmatprep.subr.bf16.mxu0 0
        %479 = vmatpush1.bf16.msra.mxu0 0
        %480 = vmatprep.subr.bf16.mxu0 0
        %481 = vmatpush1.bf16.msra.mxu0 %v405
        %482 = vmatprep.subr.bf16.mxu0 0
        %483 = vmatpush2.bf16.msra.mxu0 0
        %484 = vmatprep.subr.bf16.mxu0 0
        %485 = vmatpush2.bf16.msra.mxu0 0
        %486 = vmatprep.subr.bf16.mxu0 0
        %487 = vmatpush2.bf16.msra.mxu0 0
        %488 = vmatprep.subr.bf16.mxu0 0
        %489 = vmatpush2.bf16.msra.mxu0 0
        %490 = vmatprep.subr.bf16.mxu0 0
        %491 = vmatpush2.bf16.msra.mxu0 0
        %492 = vmatprep.subr.bf16.mxu0 0
        %493 = vmatpush2.bf16.msra.mxu0 0
        %494 = vmatprep.subr.bf16.mxu0 0
        %495 = vmatpush2.bf16.msra.mxu0 0
        %496 = vmatprep.subr.bf16.mxu0 0
        %497 = vmatpush2.bf16.msra.mxu0 0
        %498 = vmatprep.mubr.bf16.mxu0 0
        %499 = vmatmul.mubr.bf16.gmra.mxu0 %v464
        %v500 = vpop.f32.mrf.mxu0
        %v501 = vadd.f32 %v394, %v500
        %v502 = vpop.f32.mrf.mxu0
        %v503 = vpop.f32.mrf.mxu0
        %v504 = vadd.f32 %v394, %v503
        %v505 = vpop.f32.mrf.mxu0
        %506 = vdwg.mxu0
        %v507 = vmax.f32 %v501, 0.0
        %v508 = vmax.f32 %v504, 0.0
        %v509 = vpack.c.bf16 %v508, %v507
        %s510 = scalar_lea.vmem %s383, 16
        %v511 = vld [vmem:[%s510] sm:$0xf]
        %v512 = vld [vmem:[%s510 + $0x4] sm:$0x3]
        %v515 = vunpack.c.l.b16 %v511
        %v516 = vunpack.c.l.b16 %v512
        %v517 = vpack.c.b16 %v516, %v515
        %v519 = vsel %vm407, %v517, 0
        %521 = vmatprep.subr.bf16.mxu0 0
        %522 = vmatpush1.bf16.msra.mxu0 0
        %523 = vmatprep.subr.bf16.mxu0 0
        %524 = vmatpush1.bf16.msra.mxu0 0
        %525 = vmatprep.subr.bf16.mxu0 0
        %526 = vmatpush1.bf16.msra.mxu0 0
        %527 = vmatprep.subr.bf16.mxu0 0
        %528 = vmatpush1.bf16.msra.mxu0 0
        %529 = vmatprep.subr.bf16.mxu0 0
        %530 = vmatpush1.bf16.msra.mxu0 0
        %531 = vmatprep.subr.bf16.mxu0 0
        %532 = vmatpush1.bf16.msra.mxu0 0
        %533 = vmatprep.subr.bf16.mxu0 0
        %534 = vmatpush1.bf16.msra.mxu0 0
        %535 = vmatprep.subr.bf16.mxu0 0
        %536 = vmatpush1.bf16.msra.mxu0 %v405
        %537 = vmatprep.subr.bf16.mxu0 0
        %538 = vmatpush2.bf16.msra.mxu0 0
        %539 = vmatprep.subr.bf16.mxu0 0
        %540 = vmatpush2.bf16.msra.mxu0 0
        %541 = vmatprep.subr.bf16.mxu0 0
        %542 = vmatpush2.bf16.msra.mxu0 0
        %543 = vmatprep.subr.bf16.mxu0 0
        %544 = vmatpush2.bf16.msra.mxu0 0
        %545 = vmatprep.subr.bf16.mxu0 0
        %546 = vmatpush2.bf16.msra.mxu0 0
        %547 = vmatprep.subr.bf16.mxu0 0
        %548 = vmatpush2.bf16.msra.mxu0 0
        %549 = vmatprep.subr.bf16.mxu0 0
        %550 = vmatpush2.bf16.msra.mxu0 0
        %551 = vmatprep.subr.bf16.mxu0 0
        %552 = vmatpush2.bf16.msra.mxu0 0
        %553 = vmatprep.mubr.bf16.mxu0 0
        %554 = vmatmul.mubr.bf16.gmra.mxu0 %v519
        %v555 = vpop.f32.mrf.mxu0
        %v556 = vadd.f32 %v394, %v555
        %v557 = vpop.f32.mrf.mxu0
        %v558 = vpop.f32.mrf.mxu0
        %v559 = vadd.f32 %v394, %v558
        %v560 = vpop.f32.mrf.mxu0
        %561 = vdwg.mxu0
        %v562 = vmax.f32 %v556, 0.0
        %v563 = vmax.f32 %v559, 0.0
        %v564 = vpack.c.bf16 %v563, %v562
        %s565 = scalar_lea.vmem %s383, 24
        %v566 = vld [vmem:[%s565] sm:$0xf]
        %v567 = vld [vmem:[%s565 + $0x4] sm:$0x3]
        %v570 = vunpack.c.l.b16 %v566
        %v571 = vunpack.c.l.b16 %v567
        %v572 = vpack.c.b16 %v571, %v570
        %v574 = vsel %vm407, %v572, 0
        %576 = vmatprep.subr.bf16.mxu0 0
        %577 = vmatpush1.bf16.msra.mxu0 0
        %578 = vmatprep.subr.bf16.mxu0 0
        %579 = vmatpush1.bf16.msra.mxu0 0
        %580 = vmatprep.subr.bf16.mxu0 0
        %581 = vmatpush1.bf16.msra.mxu0 0
        %582 = vmatprep.subr.bf16.mxu0 0
        %583 = vmatpush1.bf16.msra.mxu0 0
        %584 = vmatprep.subr.bf16.mxu0 0
        %585 = vmatpush1.bf16.msra.mxu0 0
        %586 = vmatprep.subr.bf16.mxu0 0
        %587 = vmatpush1.bf16.msra.mxu0 0
        %588 = vmatprep.subr.bf16.mxu0 0
        %589 = vmatpush1.bf16.msra.mxu0 0
        %590 = vmatprep.subr.bf16.mxu0 0
        %591 = vmatpush1.bf16.msra.mxu0 %v405
        %592 = vmatprep.subr.bf16.mxu0 0
        %593 = vmatpush2.bf16.msra.mxu0 0
        %594 = vmatprep.subr.bf16.mxu0 0
        %595 = vmatpush2.bf16.msra.mxu0 0
        %596 = vmatprep.subr.bf16.mxu0 0
        %597 = vmatpush2.bf16.msra.mxu0 0
        %598 = vmatprep.subr.bf16.mxu0 0
        %599 = vmatpush2.bf16.msra.mxu0 0
        %600 = vmatprep.subr.bf16.mxu0 0
        %601 = vmatpush2.bf16.msra.mxu0 0
        %602 = vmatprep.subr.bf16.mxu0 0
        %603 = vmatpush2.bf16.msra.mxu0 0
        %604 = vmatprep.subr.bf16.mxu0 0
        %605 = vmatpush2.bf16.msra.mxu0 0
        %606 = vmatprep.subr.bf16.mxu0 0
        %607 = vmatpush2.bf16.msra.mxu0 0
        %608 = vmatprep.mubr.bf16.mxu0 0
        %609 = vmatmul.mubr.bf16.gmra.mxu0 %v574
        %v610 = vpop.f32.mrf.mxu0
        %v611 = vadd.f32 %v394, %v610
        %v612 = vpop.f32.mrf.mxu0
        %v613 = vpop.f32.mrf.mxu0
        %v614 = vadd.f32 %v394, %v613
        %v615 = vpop.f32.mrf.mxu0
        %616 = vdwg.mxu0
        %v617 = vmax.f32 %v611, 0.0
        %v618 = vmax.f32 %v614, 0.0
        %v619 = vpack.c.bf16 %v618, %v617
        %v620 = vld [vmem:[%s4] sm:$0x1]
        %v621 = vld [vmem:[%s3] sm:$0xf]
        %v622 = vld [vmem:[%s3 + $0x4] sm:$0xf]
        %v623 = vld [vmem:[%s3 + $0x8] sm:$0xf]
        %v624 = vld [vmem:[%s3 + $0xc] sm:$0xf]
        %v625 = vld [vmem:[%s3 + $0x10] sm:$0xf]
        %v626 = vld [vmem:[%s3 + $0x14] sm:$0xf]
        %v627 = vld [vmem:[%s3 + $0x18] sm:$0xf]
        %v628 = vld [vmem:[%s3 + $0x1c] sm:$0xf]
        %v629 = vld [vmem:[%s3 + $0x20] sm:$0xf]
        %v630 = vld [vmem:[%s3 + $0x24] sm:$0xf]
        %v631 = vld [vmem:[%s3 + $0x28] sm:$0xf]
        %v632 = vld [vmem:[%s3 + $0x2c] sm:$0xf]
        %v633 = vld [vmem:[%s3 + $0x30] sm:$0xf]
        %v634 = vld [vmem:[%s3 + $0x34] sm:$0xf]
        %v635 = vld [vmem:[%s3 + $0x38] sm:$0xf]
        %v636 = vld [vmem:[%s3 + $0x3c] sm:$0xf]
        %s637 = scalar_lea.vmem %s3, 64
        %v638 = vld [vmem:[%s637] sm:$0xf]
        %v639 = vld [vmem:[%s637 + $0x4] sm:$0xf]
        %v640 = vld [vmem:[%s637 + $0x8] sm:$0xf]
        %v641 = vld [vmem:[%s637 + $0xc] sm:$0xf]
        %v642 = vld [vmem:[%s637 + $0x10] sm:$0xf]
        %v643 = vld [vmem:[%s637 + $0x14] sm:$0xf]
        %v644 = vld [vmem:[%s637 + $0x18] sm:$0xf]
        %v645 = vld [vmem:[%s637 + $0x1c] sm:$0xf]
        %v646 = vld [vmem:[%s637 + $0x20] sm:$0xf]
        %v647 = vld [vmem:[%s637 + $0x24] sm:$0xf]
        %v648 = vld [vmem:[%s637 + $0x28] sm:$0xf]
        %v649 = vld [vmem:[%s637 + $0x2c] sm:$0xf]
        %v650 = vld [vmem:[%s637 + $0x30] sm:$0xf]
        %v651 = vld [vmem:[%s637 + $0x34] sm:$0xf]
        %v652 = vld [vmem:[%s637 + $0x38] sm:$0xf]
        %v653 = vld [vmem:[%s637 + $0x3c] sm:$0xf]
        %v670 = vunpack.c.l.b16 %v638
        %v671 = vunpack.c.l.b16 %v639
        %v672 = vunpack.c.l.b16 %v640
        %v673 = vunpack.c.l.b16 %v641
        %v674 = vunpack.c.l.b16 %v642
        %v675 = vunpack.c.l.b16 %v643
        %v676 = vunpack.c.l.b16 %v644
        %v677 = vunpack.c.l.b16 %v645
        %v678 = vunpack.c.l.b16 %v646
        %v679 = vunpack.c.l.b16 %v647
        %v680 = vunpack.c.l.b16 %v648
        %v681 = vunpack.c.l.b16 %v649
        %v682 = vunpack.c.l.b16 %v650
        %v683 = vunpack.c.l.b16 %v651
        %v684 = vunpack.c.l.b16 %v652
        %v685 = vunpack.c.l.b16 %v653
        %v686 = vpack.c.b16 %v671, %v670
        %v687 = vpack.c.b16 %v673, %v672
        %v688 = vpack.c.b16 %v675, %v674
        %v689 = vpack.c.b16 %v677, %v676
        %v690 = vpack.c.b16 %v679, %v678
        %v691 = vpack.c.b16 %v681, %v680
        %v692 = vpack.c.b16 %v683, %v682
        %v693 = vpack.c.b16 %v685, %v684
        %702 = vmatprep.subr.bf16.mxu0 0
        %703 = vmatpush1.bf16.msra.mxu0 %v693
        %704 = vmatprep.subr.bf16.mxu0 0
        %705 = vmatpush1.bf16.msra.mxu0 %v692
        %706 = vmatprep.subr.bf16.mxu0 0
        %707 = vmatpush1.bf16.msra.mxu0 %v691
        %708 = vmatprep.subr.bf16.mxu0 0
        %709 = vmatpush1.bf16.msra.mxu0 %v690
        %710 = vmatprep.subr.bf16.mxu0 0
        %711 = vmatpush1.bf16.msra.mxu0 %v689
        %712 = vmatprep.subr.bf16.mxu0 0
        %713 = vmatpush1.bf16.msra.mxu0 %v688
        %714 = vmatprep.subr.bf16.mxu0 0
        %715 = vmatpush1.bf16.msra.mxu0 %v687
        %716 = vmatprep.subr.bf16.mxu0 0
        %717 = vmatpush1.bf16.msra.mxu0 %v686
        %718 = vmatprep.subr.bf16.mxu0 0
        %719 = vmatpush2.bf16.msra.mxu0 0
        %720 = vmatprep.subr.bf16.mxu0 0
        %721 = vmatpush2.bf16.msra.mxu0 0
        %722 = vmatprep.subr.bf16.mxu0 0
        %723 = vmatpush2.bf16.msra.mxu0 0
        %724 = vmatprep.subr.bf16.mxu0 0
        %725 = vmatpush2.bf16.msra.mxu0 0
        %726 = vmatprep.subr.bf16.mxu0 0
        %727 = vmatpush2.bf16.msra.mxu0 0
        %728 = vmatprep.subr.bf16.mxu0 0
        %729 = vmatpush2.bf16.msra.mxu0 0
        %730 = vmatprep.subr.bf16.mxu0 0
        %731 = vmatpush2.bf16.msra.mxu0 0
        %732 = vmatprep.subr.bf16.mxu0 0
        %733 = vmatpush2.bf16.msra.mxu0 0
        %734 = vmatprep.mubr.bf16.mxu0 0
        %735 = vmatmul.mubr.bf16.gmra.mxu0 %v509
        %v736 = vpop.f32.mrf.mxu0
        %v737 = vadd.f32 0.0, %v736
        %v738 = vpop.f32.mrf.mxu0
        %v739 = vpop.f32.mrf.mxu0
        %v740 = vpop.f32.mrf.mxu0
        %741 = vdwg.mxu0
        %v758 = vunpack.c.l.b16 %v621
        %v759 = vunpack.c.l.b16 %v622
        %v760 = vunpack.c.l.b16 %v623
        %v761 = vunpack.c.l.b16 %v624
        %v762 = vunpack.c.l.b16 %v625
        %v763 = vunpack.c.l.b16 %v626
        %v764 = vunpack.c.l.b16 %v627
        %v765 = vunpack.c.l.b16 %v628
        %v766 = vunpack.c.l.b16 %v629
        %v767 = vunpack.c.l.b16 %v630
        %v768 = vunpack.c.l.b16 %v631
        %v769 = vunpack.c.l.b16 %v632
        %v770 = vunpack.c.l.b16 %v633
        %v771 = vunpack.c.l.b16 %v634
        %v772 = vunpack.c.l.b16 %v635
        %v773 = vunpack.c.l.b16 %v636
        %v774 = vpack.c.b16 %v759, %v758
        %v775 = vpack.c.b16 %v761, %v760
        %v776 = vpack.c.b16 %v763, %v762
        %v777 = vpack.c.b16 %v765, %v764
        %v778 = vpack.c.b16 %v767, %v766
        %v779 = vpack.c.b16 %v769, %v768
        %v780 = vpack.c.b16 %v771, %v770
        %v781 = vpack.c.b16 %v773, %v772
        %790 = vmatprep.subr.bf16.mxu0 0
        %791 = vmatpush1.bf16.msra.mxu0 %v781
        %792 = vmatprep.subr.bf16.mxu0 0
        %793 = vmatpush1.bf16.msra.mxu0 %v780
        %794 = vmatprep.subr.bf16.mxu0 0
        %795 = vmatpush1.bf16.msra.mxu0 %v779
        %796 = vmatprep.subr.bf16.mxu0 0
        %797 = vmatpush1.bf16.msra.mxu0 %v778
        %798 = vmatprep.subr.bf16.mxu0 0
        %799 = vmatpush1.bf16.msra.mxu0 %v777
        %800 = vmatprep.subr.bf16.mxu0 0
        %801 = vmatpush1.bf16.msra.mxu0 %v776
        %802 = vmatprep.subr.bf16.mxu0 0
        %803 = vmatpush1.bf16.msra.mxu0 %v775
        %804 = vmatprep.subr.bf16.mxu0 0
        %805 = vmatpush1.bf16.msra.mxu0 %v774
        %806 = vmatprep.subr.bf16.mxu0 0
        %807 = vmatpush2.bf16.msra.mxu0 0
        %808 = vmatprep.subr.bf16.mxu0 0
        %809 = vmatpush2.bf16.msra.mxu0 0
        %810 = vmatprep.subr.bf16.mxu0 0
        %811 = vmatpush2.bf16.msra.mxu0 0
        %812 = vmatprep.subr.bf16.mxu0 0
        %813 = vmatpush2.bf16.msra.mxu0 0
        %814 = vmatprep.subr.bf16.mxu0 0
        %815 = vmatpush2.bf16.msra.mxu0 0
        %816 = vmatprep.subr.bf16.mxu0 0
        %817 = vmatpush2.bf16.msra.mxu0 0
        %818 = vmatprep.subr.bf16.mxu0 0
        %819 = vmatpush2.bf16.msra.mxu0 0
        %820 = vmatprep.subr.bf16.mxu0 0
        %821 = vmatpush2.bf16.msra.mxu0 0
        %822 = vmatprep.mubr.bf16.mxu0 0
        %823 = vmatmul.mubr.bf16.gmra.mxu0 %v454
        %v824 = vpop.f32.mrf.mxu0
        %v825 = vadd.f32 %v737, %v824
        %v826 = vpop.f32.mrf.mxu0
        %v827 = vpop.f32.mrf.mxu0
        %v828 = vpop.f32.mrf.mxu0
        %829 = vdwg.mxu0
        %s830 = scalar_lea.vmem %s3, 128
        %v831 = vld [vmem:[%s830] sm:$0xf]
        %v832 = vld [vmem:[%s830 + $0x4] sm:$0xf]
        %v833 = vld [vmem:[%s830 + $0x8] sm:$0xf]
        %v834 = vld [vmem:[%s830 + $0xc] sm:$0xf]
        %v835 = vld [vmem:[%s830 + $0x10] sm:$0xf]
        %v836 = vld [vmem:[%s830 + $0x14] sm:$0xf]
        %v837 = vld [vmem:[%s830 + $0x18] sm:$0xf]
        %v838 = vld [vmem:[%s830 + $0x1c] sm:$0xf]
        %v839 = vld [vmem:[%s830 + $0x20] sm:$0xf]
        %v840 = vld [vmem:[%s830 + $0x24] sm:$0xf]
        %v841 = vld [vmem:[%s830 + $0x28] sm:$0xf]
        %v842 = vld [vmem:[%s830 + $0x2c] sm:$0xf]
        %v843 = vld [vmem:[%s830 + $0x30] sm:$0xf]
        %v844 = vld [vmem:[%s830 + $0x34] sm:$0xf]
        %v845 = vld [vmem:[%s830 + $0x38] sm:$0xf]
        %v846 = vld [vmem:[%s830 + $0x3c] sm:$0xf]
        %v863 = vunpack.c.l.b16 %v831
        %v864 = vunpack.c.l.b16 %v832
        %v865 = vunpack.c.l.b16 %v833
        %v866 = vunpack.c.l.b16 %v834
        %v867 = vunpack.c.l.b16 %v835
        %v868 = vunpack.c.l.b16 %v836
        %v869 = vunpack.c.l.b16 %v837
        %v870 = vunpack.c.l.b16 %v838
        %v871 = vunpack.c.l.b16 %v839
        %v872 = vunpack.c.l.b16 %v840
        %v873 = vunpack.c.l.b16 %v841
        %v874 = vunpack.c.l.b16 %v842
        %v875 = vunpack.c.l.b16 %v843
        %v876 = vunpack.c.l.b16 %v844
        %v877 = vunpack.c.l.b16 %v845
        %v878 = vunpack.c.l.b16 %v846
        %v879 = vpack.c.b16 %v864, %v863
        %v880 = vpack.c.b16 %v866, %v865
        %v881 = vpack.c.b16 %v868, %v867
        %v882 = vpack.c.b16 %v870, %v869
        %v883 = vpack.c.b16 %v872, %v871
        %v884 = vpack.c.b16 %v874, %v873
        %v885 = vpack.c.b16 %v876, %v875
        %v886 = vpack.c.b16 %v878, %v877
        %895 = vmatprep.subr.bf16.mxu0 0
        %896 = vmatpush1.bf16.msra.mxu0 %v886
        %897 = vmatprep.subr.bf16.mxu0 0
        %898 = vmatpush1.bf16.msra.mxu0 %v885
        %899 = vmatprep.subr.bf16.mxu0 0
        %900 = vmatpush1.bf16.msra.mxu0 %v884
        %901 = vmatprep.subr.bf16.mxu0 0
        %902 = vmatpush1.bf16.msra.mxu0 %v883
        %903 = vmatprep.subr.bf16.mxu0 0
        %904 = vmatpush1.bf16.msra.mxu0 %v882
        %905 = vmatprep.subr.bf16.mxu0 0
        %906 = vmatpush1.bf16.msra.mxu0 %v881
        %907 = vmatprep.subr.bf16.mxu0 0
        %908 = vmatpush1.bf16.msra.mxu0 %v880
        %909 = vmatprep.subr.bf16.mxu0 0
        %910 = vmatpush1.bf16.msra.mxu0 %v879
        %911 = vmatprep.subr.bf16.mxu0 0
        %912 = vmatpush2.bf16.msra.mxu0 0
        %913 = vmatprep.subr.bf16.mxu0 0
        %914 = vmatpush2.bf16.msra.mxu0 0
        %915 = vmatprep.subr.bf16.mxu0 0
        %916 = vmatpush2.bf16.msra.mxu0 0
        %917 = vmatprep.subr.bf16.mxu0 0
        %918 = vmatpush2.bf16.msra.mxu0 0
        %919 = vmatprep.subr.bf16.mxu0 0
        %920 = vmatpush2.bf16.msra.mxu0 0
        %921 = vmatprep.subr.bf16.mxu0 0
        %922 = vmatpush2.bf16.msra.mxu0 0
        %923 = vmatprep.subr.bf16.mxu0 0
        %924 = vmatpush2.bf16.msra.mxu0 0
        %925 = vmatprep.subr.bf16.mxu0 0
        %926 = vmatpush2.bf16.msra.mxu0 0
        %927 = vmatprep.mubr.bf16.mxu0 0
        %928 = vmatmul.mubr.bf16.gmra.mxu0 %v564
        %v929 = vpop.f32.mrf.mxu0
        %v930 = vadd.f32 0.0, %v929
        %v931 = vpop.f32.mrf.mxu0
        %v932 = vpop.f32.mrf.mxu0
        %v933 = vpop.f32.mrf.mxu0
        %934 = vdwg.mxu0
        %v935 = vadd.f32 %v825, %v930
        %s936 = scalar_lea.vmem %s3, 192
        %v937 = vld [vmem:[%s936] sm:$0xf]
        %v938 = vld [vmem:[%s936 + $0x4] sm:$0xf]
        %v939 = vld [vmem:[%s936 + $0x8] sm:$0xf]
        %v940 = vld [vmem:[%s936 + $0xc] sm:$0xf]
        %v941 = vld [vmem:[%s936 + $0x10] sm:$0xf]
        %v942 = vld [vmem:[%s936 + $0x14] sm:$0xf]
        %v943 = vld [vmem:[%s936 + $0x18] sm:$0xf]
        %v944 = vld [vmem:[%s936 + $0x1c] sm:$0xf]
        %v945 = vld [vmem:[%s936 + $0x20] sm:$0xf]
        %v946 = vld [vmem:[%s936 + $0x24] sm:$0xf]
        %v947 = vld [vmem:[%s936 + $0x28] sm:$0xf]
        %v948 = vld [vmem:[%s936 + $0x2c] sm:$0xf]
        %v949 = vld [vmem:[%s936 + $0x30] sm:$0xf]
        %v950 = vld [vmem:[%s936 + $0x34] sm:$0xf]
        %v951 = vld [vmem:[%s936 + $0x38] sm:$0xf]
        %v952 = vld [vmem:[%s936 + $0x3c] sm:$0xf]
        %v954 = vshrl.u32 %v454, 16
        %v956 = vshll.u32 %v454, 16
        %v958 = vrot.slane %v956, 1
        %v959 = vor.u32 %v954, %v958
        %v977 = vunpack.c.l.b16 %v937
        %v978 = vunpack.c.l.b16 %v938
        %v979 = vunpack.c.l.b16 %v939
        %v980 = vunpack.c.l.b16 %v940
        %v981 = vunpack.c.l.b16 %v941
        %v982 = vunpack.c.l.b16 %v942
        %v983 = vunpack.c.l.b16 %v943
        %v984 = vunpack.c.l.b16 %v944
        %v985 = vunpack.c.l.b16 %v945
        %v986 = vunpack.c.l.b16 %v946
        %v987 = vunpack.c.l.b16 %v947
        %v988 = vunpack.c.l.b16 %v948
        %v989 = vunpack.c.l.b16 %v949
        %v990 = vunpack.c.l.b16 %v950
        %v991 = vunpack.c.l.b16 %v951
        %v992 = vunpack.c.l.b16 %v952
        %v993 = vpack.c.b16 %v978, %v977
        %v994 = vpack.c.b16 %v980, %v979
        %v995 = vpack.c.b16 %v982, %v981
        %v996 = vpack.c.b16 %v984, %v983
        %v997 = vpack.c.b16 %v986, %v985
        %v998 = vpack.c.b16 %v988, %v987
        %v999 = vpack.c.b16 %v990, %v989
        %v1000 = vpack.c.b16 %v992, %v991
        %1009 = vmatprep.subr.bf16.mxu0 0
        %1010 = vmatpush1.bf16.msra.mxu0 %v1000
        %1011 = vmatprep.subr.bf16.mxu0 0
        %1012 = vmatpush1.bf16.msra.mxu0 %v999
        %1013 = vmatprep.subr.bf16.mxu0 0
        %1014 = vmatpush1.bf16.msra.mxu0 %v998
        %1015 = vmatprep.subr.bf16.mxu0 0
        %1016 = vmatpush1.bf16.msra.mxu0 %v997
        %1017 = vmatprep.subr.bf16.mxu0 0
        %1018 = vmatpush1.bf16.msra.mxu0 %v996
        %1019 = vmatprep.subr.bf16.mxu0 0
        %1020 = vmatpush1.bf16.msra.mxu0 %v995
        %1021 = vmatprep.subr.bf16.mxu0 0
        %1022 = vmatpush1.bf16.msra.mxu0 %v994
        %1023 = vmatprep.subr.bf16.mxu0 0
        %1024 = vmatpush1.bf16.msra.mxu0 %v993
        %1025 = vmatprep.subr.bf16.mxu0 0
        %1026 = vmatpush2.bf16.msra.mxu0 0
        %1027 = vmatprep.subr.bf16.mxu0 0
        %1028 = vmatpush2.bf16.msra.mxu0 0
        %1029 = vmatprep.subr.bf16.mxu0 0
        %1030 = vmatpush2.bf16.msra.mxu0 0
        %1031 = vmatprep.subr.bf16.mxu0 0
        %1032 = vmatpush2.bf16.msra.mxu0 0
        %1033 = vmatprep.subr.bf16.mxu0 0
        %1034 = vmatpush2.bf16.msra.mxu0 0
        %1035 = vmatprep.subr.bf16.mxu0 0
        %1036 = vmatpush2.bf16.msra.mxu0 0
        %1037 = vmatprep.subr.bf16.mxu0 0
        %1038 = vmatpush2.bf16.msra.mxu0 0
        %1039 = vmatprep.subr.bf16.mxu0 0
        %1040 = vmatpush2.bf16.msra.mxu0 0
        %1041 = vmatprep.mubr.bf16.mxu0 0
        %1042 = vmatmul.mubr.bf16.gmra.mxu0 %v959
        %v1043 = vpop.f32.mrf.mxu0
        %v1044 = vadd.f32 0.0, %v1043
        %v1045 = vpop.f32.mrf.mxu0
        %v1046 = vpop.f32.mrf.mxu0
        %v1047 = vpop.f32.mrf.mxu0
        %1048 = vdwg.mxu0
        %v1049 = vadd.f32 %v935, %v1044
        %s1050 = scalar_lea.vmem %s3, 256
        %v1051 = vld [vmem:[%s1050] sm:$0xf]
        %v1052 = vld [vmem:[%s1050 + $0x4] sm:$0xf]
        %v1053 = vld [vmem:[%s1050 + $0x8] sm:$0xf]
        %v1054 = vld [vmem:[%s1050 + $0xc] sm:$0xf]
        %v1055 = vld [vmem:[%s1050 + $0x10] sm:$0xf]
        %v1056 = vld [vmem:[%s1050 + $0x14] sm:$0xf]
        %v1057 = vld [vmem:[%s1050 + $0x18] sm:$0xf]
        %v1058 = vld [vmem:[%s1050 + $0x1c] sm:$0xf]
        %v1059 = vld [vmem:[%s1050 + $0x20] sm:$0xf]
        %v1060 = vld [vmem:[%s1050 + $0x24] sm:$0xf]
        %v1061 = vld [vmem:[%s1050 + $0x28] sm:$0xf]
        %v1062 = vld [vmem:[%s1050 + $0x2c] sm:$0xf]
        %v1063 = vld [vmem:[%s1050 + $0x30] sm:$0xf]
        %v1064 = vld [vmem:[%s1050 + $0x34] sm:$0xf]
        %v1065 = vld [vmem:[%s1050 + $0x38] sm:$0xf]
        %v1066 = vld [vmem:[%s1050 + $0x3c] sm:$0xf]
        %v1068 = vshrl.u32 %v509, 16
        %v1070 = vshll.u32 %v509, 16
        %v1072 = vrot.slane %v1070, 1
        %v1073 = vor.u32 %v1068, %v1072
        %v1091 = vunpack.c.l.b16 %v1051
        %v1092 = vunpack.c.l.b16 %v1052
        %v1093 = vunpack.c.l.b16 %v1053
        %v1094 = vunpack.c.l.b16 %v1054
        %v1095 = vunpack.c.l.b16 %v1055
        %v1096 = vunpack.c.l.b16 %v1056
        %v1097 = vunpack.c.l.b16 %v1057
        %v1098 = vunpack.c.l.b16 %v1058
        %v1099 = vunpack.c.l.b16 %v1059
        %v1100 = vunpack.c.l.b16 %v1060
        %v1101 = vunpack.c.l.b16 %v1061
        %v1102 = vunpack.c.l.b16 %v1062
        %v1103 = vunpack.c.l.b16 %v1063
        %v1104 = vunpack.c.l.b16 %v1064
        %v1105 = vunpack.c.l.b16 %v1065
        %v1106 = vunpack.c.l.b16 %v1066
        %v1107 = vpack.c.b16 %v1092, %v1091
        %v1108 = vpack.c.b16 %v1094, %v1093
        %v1109 = vpack.c.b16 %v1096, %v1095
        %v1110 = vpack.c.b16 %v1098, %v1097
        %v1111 = vpack.c.b16 %v1100, %v1099
        %v1112 = vpack.c.b16 %v1102, %v1101
        %v1113 = vpack.c.b16 %v1104, %v1103
        %v1114 = vpack.c.b16 %v1106, %v1105
        %1123 = vmatprep.subr.bf16.mxu0 0
        %1124 = vmatpush1.bf16.msra.mxu0 %v1114
        %1125 = vmatprep.subr.bf16.mxu0 0
        %1126 = vmatpush1.bf16.msra.mxu0 %v1113
        %1127 = vmatprep.subr.bf16.mxu0 0
        %1128 = vmatpush1.bf16.msra.mxu0 %v1112
        %1129 = vmatprep.subr.bf16.mxu0 0
        %1130 = vmatpush1.bf16.msra.mxu0 %v1111
        %1131 = vmatprep.subr.bf16.mxu0 0
        %1132 = vmatpush1.bf16.msra.mxu0 %v1110
        %1133 = vmatprep.subr.bf16.mxu0 0
        %1134 = vmatpush1.bf16.msra.mxu0 %v1109
        %1135 = vmatprep.subr.bf16.mxu0 0
        %1136 = vmatpush1.bf16.msra.mxu0 %v1108
        %1137 = vmatprep.subr.bf16.mxu0 0
        %1138 = vmatpush1.bf16.msra.mxu0 %v1107
        %1139 = vmatprep.subr.bf16.mxu0 0
        %1140 = vmatpush2.bf16.msra.mxu0 0
        %1141 = vmatprep.subr.bf16.mxu0 0
        %1142 = vmatpush2.bf16.msra.mxu0 0
        %1143 = vmatprep.subr.bf16.mxu0 0
        %1144 = vmatpush2.bf16.msra.mxu0 0
        %1145 = vmatprep.subr.bf16.mxu0 0
        %1146 = vmatpush2.bf16.msra.mxu0 0
        %1147 = vmatprep.subr.bf16.mxu0 0
        %1148 = vmatpush2.bf16.msra.mxu0 0
        %1149 = vmatprep.subr.bf16.mxu0 0
        %1150 = vmatpush2.bf16.msra.mxu0 0
        %1151 = vmatprep.subr.bf16.mxu0 0
        %1152 = vmatpush2.bf16.msra.mxu0 0
        %1153 = vmatprep.subr.bf16.mxu0 0
        %1154 = vmatpush2.bf16.msra.mxu0 0
        %1155 = vmatprep.mubr.bf16.mxu0 0
        %1156 = vmatmul.mubr.bf16.gmra.mxu0 %v1073
        %v1157 = vpop.f32.mrf.mxu0
        %v1158 = vadd.f32 0.0, %v1157
        %v1159 = vpop.f32.mrf.mxu0
        %v1160 = vpop.f32.mrf.mxu0
        %v1161 = vpop.f32.mrf.mxu0
        %1162 = vdwg.mxu0
        %v1163 = vadd.f32 %v1049, %v1158
        %s1164 = scalar_lea.vmem %s3, 320
        %v1165 = vld [vmem:[%s1164] sm:$0xf]
        %v1166 = vld [vmem:[%s1164 + $0x4] sm:$0xf]
        %v1167 = vld [vmem:[%s1164 + $0x8] sm:$0xf]
        %v1168 = vld [vmem:[%s1164 + $0xc] sm:$0xf]
        %v1169 = vld [vmem:[%s1164 + $0x10] sm:$0xf]
        %v1170 = vld [vmem:[%s1164 + $0x14] sm:$0xf]
        %v1171 = vld [vmem:[%s1164 + $0x18] sm:$0xf]
        %v1172 = vld [vmem:[%s1164 + $0x1c] sm:$0xf]
        %v1173 = vld [vmem:[%s1164 + $0x20] sm:$0xf]
        %v1174 = vld [vmem:[%s1164 + $0x24] sm:$0xf]
        %v1175 = vld [vmem:[%s1164 + $0x28] sm:$0xf]
        %v1176 = vld [vmem:[%s1164 + $0x2c] sm:$0xf]
        %v1177 = vld [vmem:[%s1164 + $0x30] sm:$0xf]
        %v1178 = vld [vmem:[%s1164 + $0x34] sm:$0xf]
        %v1179 = vld [vmem:[%s1164 + $0x38] sm:$0xf]
        %v1180 = vld [vmem:[%s1164 + $0x3c] sm:$0xf]
        %v1182 = vshrl.u32 %v564, 16
        %v1184 = vshll.u32 %v564, 16
        %v1186 = vrot.slane %v1184, 1
        %v1187 = vor.u32 %v1182, %v1186
        %v1205 = vunpack.c.l.b16 %v1165
        %v1206 = vunpack.c.l.b16 %v1166
        %v1207 = vunpack.c.l.b16 %v1167
        %v1208 = vunpack.c.l.b16 %v1168
        %v1209 = vunpack.c.l.b16 %v1169
        %v1210 = vunpack.c.l.b16 %v1170
        %v1211 = vunpack.c.l.b16 %v1171
        %v1212 = vunpack.c.l.b16 %v1172
        %v1213 = vunpack.c.l.b16 %v1173
        %v1214 = vunpack.c.l.b16 %v1174
        %v1215 = vunpack.c.l.b16 %v1175
        %v1216 = vunpack.c.l.b16 %v1176
        %v1217 = vunpack.c.l.b16 %v1177
        %v1218 = vunpack.c.l.b16 %v1178
        %v1219 = vunpack.c.l.b16 %v1179
        %v1220 = vunpack.c.l.b16 %v1180
        %v1221 = vpack.c.b16 %v1206, %v1205
        %v1222 = vpack.c.b16 %v1208, %v1207
        %v1223 = vpack.c.b16 %v1210, %v1209
        %v1224 = vpack.c.b16 %v1212, %v1211
        %v1225 = vpack.c.b16 %v1214, %v1213
        %v1226 = vpack.c.b16 %v1216, %v1215
        %v1227 = vpack.c.b16 %v1218, %v1217
        %v1228 = vpack.c.b16 %v1220, %v1219
        %1237 = vmatprep.subr.bf16.mxu0 0
        %1238 = vmatpush1.bf16.msra.mxu0 %v1228
        %1239 = vmatprep.subr.bf16.mxu0 0
        %1240 = vmatpush1.bf16.msra.mxu0 %v1227
        %1241 = vmatprep.subr.bf16.mxu0 0
        %1242 = vmatpush1.bf16.msra.mxu0 %v1226
        %1243 = vmatprep.subr.bf16.mxu0 0
        %1244 = vmatpush1.bf16.msra.mxu0 %v1225
        %1245 = vmatprep.subr.bf16.mxu0 0
        %1246 = vmatpush1.bf16.msra.mxu0 %v1224
        %1247 = vmatprep.subr.bf16.mxu0 0
        %1248 = vmatpush1.bf16.msra.mxu0 %v1223
        %1249 = vmatprep.subr.bf16.mxu0 0
        %1250 = vmatpush1.bf16.msra.mxu0 %v1222
        %1251 = vmatprep.subr.bf16.mxu0 0
        %1252 = vmatpush1.bf16.msra.mxu0 %v1221
        %1253 = vmatprep.subr.bf16.mxu0 0
        %1254 = vmatpush2.bf16.msra.mxu0 0
        %1255 = vmatprep.subr.bf16.mxu0 0
        %1256 = vmatpush2.bf16.msra.mxu0 0
        %1257 = vmatprep.subr.bf16.mxu0 0
        %1258 = vmatpush2.bf16.msra.mxu0 0
        %1259 = vmatprep.subr.bf16.mxu0 0
        %1260 = vmatpush2.bf16.msra.mxu0 0
        %1261 = vmatprep.subr.bf16.mxu0 0
        %1262 = vmatpush2.bf16.msra.mxu0 0
        %1263 = vmatprep.subr.bf16.mxu0 0
        %1264 = vmatpush2.bf16.msra.mxu0 0
        %1265 = vmatprep.subr.bf16.mxu0 0
        %1266 = vmatpush2.bf16.msra.mxu0 0
        %1267 = vmatprep.subr.bf16.mxu0 0
        %1268 = vmatpush2.bf16.msra.mxu0 0
        %1269 = vmatprep.mubr.bf16.mxu0 0
        %1270 = vmatmul.mubr.bf16.gmra.mxu0 %v1187
        %v1271 = vpop.f32.mrf.mxu0
        %v1272 = vadd.f32 0.0, %v1271
        %v1273 = vpop.f32.mrf.mxu0
        %v1274 = vpop.f32.mrf.mxu0
        %v1275 = vpop.f32.mrf.mxu0
        %1276 = vdwg.mxu0
        %v1277 = vadd.f32 %v1163, %v1272
        %s1278 = scalar_lea.vmem %s3, 384
        %v1279 = vld [vmem:[%s1278] sm:$0xf]
        %v1280 = vld [vmem:[%s1278 + $0x4] sm:$0xf]
        %v1281 = vld [vmem:[%s1278 + $0x8] sm:$0xf]
        %v1282 = vld [vmem:[%s1278 + $0xc] sm:$0xf]
        %v1283 = vld [vmem:[%s1278 + $0x10] sm:$0xf]
        %v1284 = vld [vmem:[%s1278 + $0x14] sm:$0xf]
        %v1285 = vld [vmem:[%s1278 + $0x18] sm:$0xf]
        %v1286 = vld [vmem:[%s1278 + $0x1c] sm:$0xf]
        %v1287 = vld [vmem:[%s1278 + $0x20] sm:$0xf]
        %v1288 = vld [vmem:[%s1278 + $0x24] sm:$0xf]
        %v1289 = vld [vmem:[%s1278 + $0x28] sm:$0xf]
        %v1290 = vld [vmem:[%s1278 + $0x2c] sm:$0xf]
        %v1291 = vld [vmem:[%s1278 + $0x30] sm:$0xf]
        %v1292 = vld [vmem:[%s1278 + $0x34] sm:$0xf]
        %v1293 = vld [vmem:[%s1278 + $0x38] sm:$0xf]
        %v1294 = vld [vmem:[%s1278 + $0x3c] sm:$0xf]
        %v1296 = vrot.slane %v454, 1
        %v1314 = vunpack.c.l.b16 %v1279
        %v1315 = vunpack.c.l.b16 %v1280
        %v1316 = vunpack.c.l.b16 %v1281
        %v1317 = vunpack.c.l.b16 %v1282
        %v1318 = vunpack.c.l.b16 %v1283
        %v1319 = vunpack.c.l.b16 %v1284
        %v1320 = vunpack.c.l.b16 %v1285
        %v1321 = vunpack.c.l.b16 %v1286
        %v1322 = vunpack.c.l.b16 %v1287
        %v1323 = vunpack.c.l.b16 %v1288
        %v1324 = vunpack.c.l.b16 %v1289
        %v1325 = vunpack.c.l.b16 %v1290
        %v1326 = vunpack.c.l.b16 %v1291
        %v1327 = vunpack.c.l.b16 %v1292
        %v1328 = vunpack.c.l.b16 %v1293
        %v1329 = vunpack.c.l.b16 %v1294
        %v1330 = vpack.c.b16 %v1315, %v1314
        %v1331 = vpack.c.b16 %v1317, %v1316
        %v1332 = vpack.c.b16 %v1319, %v1318
        %v1333 = vpack.c.b16 %v1321, %v1320
        %v1334 = vpack.c.b16 %v1323, %v1322
        %v1335 = vpack.c.b16 %v1325, %v1324
        %v1336 = vpack.c.b16 %v1327, %v1326
        %v1337 = vpack.c.b16 %v1329, %v1328
        %1346 = vmatprep.subr.bf16.mxu0 0
        %1347 = vmatpush1.bf16.msra.mxu0 %v1337
        %1348 = vmatprep.subr.bf16.mxu0 0
        %1349 = vmatpush1.bf16.msra.mxu0 %v1336
        %1350 = vmatprep.subr.bf16.mxu0 0
        %1351 = vmatpush1.bf16.msra.mxu0 %v1335
        %1352 = vmatprep.subr.bf16.mxu0 0
        %1353 = vmatpush1.bf16.msra.mxu0 %v1334
        %1354 = vmatprep.subr.bf16.mxu0 0
        %1355 = vmatpush1.bf16.msra.mxu0 %v1333
        %1356 = vmatprep.subr.bf16.mxu0 0
        %1357 = vmatpush1.bf16.msra.mxu0 %v1332
        %1358 = vmatprep.subr.bf16.mxu0 0
        %1359 = vmatpush1.bf16.msra.mxu0 %v1331
        %1360 = vmatprep.subr.bf16.mxu0 0
        %1361 = vmatpush1.bf16.msra.mxu0 %v1330
        %1362 = vmatprep.subr.bf16.mxu0 0
        %1363 = vmatpush2.bf16.msra.mxu0 0
        %1364 = vmatprep.subr.bf16.mxu0 0
        %1365 = vmatpush2.bf16.msra.mxu0 0
        %1366 = vmatprep.subr.bf16.mxu0 0
        %1367 = vmatpush2.bf16.msra.mxu0 0
        %1368 = vmatprep.subr.bf16.mxu0 0
        %1369 = vmatpush2.bf16.msra.mxu0 0
        %1370 = vmatprep.subr.bf16.mxu0 0
        %1371 = vmatpush2.bf16.msra.mxu0 0
        %1372 = vmatprep.subr.bf16.mxu0 0
        %1373 = vmatpush2.bf16.msra.mxu0 0
        %1374 = vmatprep.subr.bf16.mxu0 0
        %1375 = vmatpush2.bf16.msra.mxu0 0
        %1376 = vmatprep.subr.bf16.mxu0 0
        %1377 = vmatpush2.bf16.msra.mxu0 0
        %1378 = vmatprep.mubr.bf16.mxu0 0
        %1379 = vmatmul.mubr.bf16.gmra.mxu0 %v1296
        %v1380 = vpop.f32.mrf.mxu0
        %v1381 = vadd.f32 0.0, %v1380
        %v1382 = vpop.f32.mrf.mxu0
        %v1383 = vpop.f32.mrf.mxu0
        %v1384 = vpop.f32.mrf.mxu0
        %1385 = vdwg.mxu0
        %v1386 = vadd.f32 %v1277, %v1381
        %s1387 = scalar_lea.vmem %s3, 448
        %v1388 = vld [vmem:[%s1387] sm:$0xf]
        %v1389 = vld [vmem:[%s1387 + $0x4] sm:$0xf]
        %v1390 = vld [vmem:[%s1387 + $0x8] sm:$0xf]
        %v1391 = vld [vmem:[%s1387 + $0xc] sm:$0xf]
        %v1392 = vld [vmem:[%s1387 + $0x10] sm:$0xf]
        %v1393 = vld [vmem:[%s1387 + $0x14] sm:$0xf]
        %v1394 = vld [vmem:[%s1387 + $0x18] sm:$0xf]
        %v1395 = vld [vmem:[%s1387 + $0x1c] sm:$0xf]
        %v1396 = vld [vmem:[%s1387 + $0x20] sm:$0xf]
        %v1397 = vld [vmem:[%s1387 + $0x24] sm:$0xf]
        %v1398 = vld [vmem:[%s1387 + $0x28] sm:$0xf]
        %v1399 = vld [vmem:[%s1387 + $0x2c] sm:$0xf]
        %v1400 = vld [vmem:[%s1387 + $0x30] sm:$0xf]
        %v1401 = vld [vmem:[%s1387 + $0x34] sm:$0xf]
        %v1402 = vld [vmem:[%s1387 + $0x38] sm:$0xf]
        %v1403 = vld [vmem:[%s1387 + $0x3c] sm:$0xf]
        %v1405 = vrot.slane %v509, 1
        %v1423 = vunpack.c.l.b16 %v1388
        %v1424 = vunpack.c.l.b16 %v1389
        %v1425 = vunpack.c.l.b16 %v1390
        %v1426 = vunpack.c.l.b16 %v1391
        %v1427 = vunpack.c.l.b16 %v1392
        %v1428 = vunpack.c.l.b16 %v1393
        %v1429 = vunpack.c.l.b16 %v1394
        %v1430 = vunpack.c.l.b16 %v1395
        %v1431 = vunpack.c.l.b16 %v1396
        %v1432 = vunpack.c.l.b16 %v1397
        %v1433 = vunpack.c.l.b16 %v1398
        %v1434 = vunpack.c.l.b16 %v1399
        %v1435 = vunpack.c.l.b16 %v1400
        %v1436 = vunpack.c.l.b16 %v1401
        %v1437 = vunpack.c.l.b16 %v1402
        %v1438 = vunpack.c.l.b16 %v1403
        %v1439 = vpack.c.b16 %v1424, %v1423
        %v1440 = vpack.c.b16 %v1426, %v1425
        %v1441 = vpack.c.b16 %v1428, %v1427
        %v1442 = vpack.c.b16 %v1430, %v1429
        %v1443 = vpack.c.b16 %v1432, %v1431
        %v1444 = vpack.c.b16 %v1434, %v1433
        %v1445 = vpack.c.b16 %v1436, %v1435
        %v1446 = vpack.c.b16 %v1438, %v1437
        %1455 = vmatprep.subr.bf16.mxu0 0
        %1456 = vmatpush1.bf16.msra.mxu0 %v1446
        %1457 = vmatprep.subr.bf16.mxu0 0
        %1458 = vmatpush1.bf16.msra.mxu0 %v1445
        %1459 = vmatprep.subr.bf16.mxu0 0
        %1460 = vmatpush1.bf16.msra.mxu0 %v1444
        %1461 = vmatprep.subr.bf16.mxu0 0
        %1462 = vmatpush1.bf16.msra.mxu0 %v1443
        %1463 = vmatprep.subr.bf16.mxu0 0
        %1464 = vmatpush1.bf16.msra.mxu0 %v1442
        %1465 = vmatprep.subr.bf16.mxu0 0
        %1466 = vmatpush1.bf16.msra.mxu0 %v1441
        %1467 = vmatprep.subr.bf16.mxu0 0
        %1468 = vmatpush1.bf16.msra.mxu0 %v1440
        %1469 = vmatprep.subr.bf16.mxu0 0
        %1470 = vmatpush1.bf16.msra.mxu0 %v1439
        %1471 = vmatprep.subr.bf16.mxu0 0
        %1472 = vmatpush2.bf16.msra.mxu0 0
        %1473 = vmatprep.subr.bf16.mxu0 0
        %1474 = vmatpush2.bf16.msra.mxu0 0
        %1475 = vmatprep.subr.bf16.mxu0 0
        %1476 = vmatpush2.bf16.msra.mxu0 0
        %1477 = vmatprep.subr.bf16.mxu0 0
        %1478 = vmatpush2.bf16.msra.mxu0 0
        %1479 = vmatprep.subr.bf16.mxu0 0
        %1480 = vmatpush2.bf16.msra.mxu0 0
        %1481 = vmatprep.subr.bf16.mxu0 0
        %1482 = vmatpush2.bf16.msra.mxu0 0
        %1483 = vmatprep.subr.bf16.mxu0 0
        %1484 = vmatpush2.bf16.msra.mxu0 0
        %1485 = vmatprep.subr.bf16.mxu0 0
        %1486 = vmatpush2.bf16.msra.mxu0 0
        %1487 = vmatprep.mubr.bf16.mxu0 0
        %1488 = vmatmul.mubr.bf16.gmra.mxu0 %v1405
        %v1489 = vpop.f32.mrf.mxu0
        %v1490 = vadd.f32 0.0, %v1489
        %v1491 = vpop.f32.mrf.mxu0
        %v1492 = vpop.f32.mrf.mxu0
        %v1493 = vpop.f32.mrf.mxu0
        %1494 = vdwg.mxu0
        %v1495 = vadd.f32 %v1386, %v1490
        %s1496 = scalar_lea.vmem %s3, 512
        %v1497 = vld [vmem:[%s1496] sm:$0xf]
        %v1498 = vld [vmem:[%s1496 + $0x4] sm:$0xf]
        %v1499 = vld [vmem:[%s1496 + $0x8] sm:$0xf]
        %v1500 = vld [vmem:[%s1496 + $0xc] sm:$0xf]
        %v1501 = vld [vmem:[%s1496 + $0x10] sm:$0xf]
        %v1502 = vld [vmem:[%s1496 + $0x14] sm:$0xf]
        %v1503 = vld [vmem:[%s1496 + $0x18] sm:$0xf]
        %v1504 = vld [vmem:[%s1496 + $0x1c] sm:$0xf]
        %v1505 = vld [vmem:[%s1496 + $0x20] sm:$0xf]
        %v1506 = vld [vmem:[%s1496 + $0x24] sm:$0xf]
        %v1507 = vld [vmem:[%s1496 + $0x28] sm:$0xf]
        %v1508 = vld [vmem:[%s1496 + $0x2c] sm:$0xf]
        %v1509 = vld [vmem:[%s1496 + $0x30] sm:$0xf]
        %v1510 = vld [vmem:[%s1496 + $0x34] sm:$0xf]
        %v1511 = vld [vmem:[%s1496 + $0x38] sm:$0xf]
        %v1512 = vld [vmem:[%s1496 + $0x3c] sm:$0xf]
        %v1514 = vrot.slane %v564, 1
        %v1532 = vunpack.c.l.b16 %v1497
        %v1533 = vunpack.c.l.b16 %v1498
        %v1534 = vunpack.c.l.b16 %v1499
        %v1535 = vunpack.c.l.b16 %v1500
        %v1536 = vunpack.c.l.b16 %v1501
        %v1537 = vunpack.c.l.b16 %v1502
        %v1538 = vunpack.c.l.b16 %v1503
        %v1539 = vunpack.c.l.b16 %v1504
        %v1540 = vunpack.c.l.b16 %v1505
        %v1541 = vunpack.c.l.b16 %v1506
        %v1542 = vunpack.c.l.b16 %v1507
        %v1543 = vunpack.c.l.b16 %v1508
        %v1544 = vunpack.c.l.b16 %v1509
        %v1545 = vunpack.c.l.b16 %v1510
        %v1546 = vunpack.c.l.b16 %v1511
        %v1547 = vunpack.c.l.b16 %v1512
        %v1548 = vpack.c.b16 %v1533, %v1532
        %v1549 = vpack.c.b16 %v1535, %v1534
        %v1550 = vpack.c.b16 %v1537, %v1536
        %v1551 = vpack.c.b16 %v1539, %v1538
        %v1552 = vpack.c.b16 %v1541, %v1540
        %v1553 = vpack.c.b16 %v1543, %v1542
        %v1554 = vpack.c.b16 %v1545, %v1544
        %v1555 = vpack.c.b16 %v1547, %v1546
        %1564 = vmatprep.subr.bf16.mxu0 0
        %1565 = vmatpush1.bf16.msra.mxu0 %v1555
        %1566 = vmatprep.subr.bf16.mxu0 0
        %1567 = vmatpush1.bf16.msra.mxu0 %v1554
        %1568 = vmatprep.subr.bf16.mxu0 0
        %1569 = vmatpush1.bf16.msra.mxu0 %v1553
        %1570 = vmatprep.subr.bf16.mxu0 0
        %1571 = vmatpush1.bf16.msra.mxu0 %v1552
        %1572 = vmatprep.subr.bf16.mxu0 0
        %1573 = vmatpush1.bf16.msra.mxu0 %v1551
        %1574 = vmatprep.subr.bf16.mxu0 0
        %1575 = vmatpush1.bf16.msra.mxu0 %v1550
        %1576 = vmatprep.subr.bf16.mxu0 0
        %1577 = vmatpush1.bf16.msra.mxu0 %v1549
        %1578 = vmatprep.subr.bf16.mxu0 0
        %1579 = vmatpush1.bf16.msra.mxu0 %v1548
        %1580 = vmatprep.subr.bf16.mxu0 0
        %1581 = vmatpush2.bf16.msra.mxu0 0
        %1582 = vmatprep.subr.bf16.mxu0 0
        %1583 = vmatpush2.bf16.msra.mxu0 0
        %1584 = vmatprep.subr.bf16.mxu0 0
        %1585 = vmatpush2.bf16.msra.mxu0 0
        %1586 = vmatprep.subr.bf16.mxu0 0
        %1587 = vmatpush2.bf16.msra.mxu0 0
        %1588 = vmatprep.subr.bf16.mxu0 0
        %1589 = vmatpush2.bf16.msra.mxu0 0
        %1590 = vmatprep.subr.bf16.mxu0 0
        %1591 = vmatpush2.bf16.msra.mxu0 0
        %1592 = vmatprep.subr.bf16.mxu0 0
        %1593 = vmatpush2.bf16.msra.mxu0 0
        %1594 = vmatprep.subr.bf16.mxu0 0
        %1595 = vmatpush2.bf16.msra.mxu0 0
        %1596 = vmatprep.mubr.bf16.mxu0 0
        %1597 = vmatmul.mubr.bf16.gmra.mxu0 %v1514
        %v1598 = vpop.f32.mrf.mxu0
        %v1599 = vadd.f32 0.0, %v1598
        %v1600 = vpop.f32.mrf.mxu0
        %v1601 = vpop.f32.mrf.mxu0
        %v1602 = vpop.f32.mrf.mxu0
        %1603 = vdwg.mxu0
        %v1604 = vadd.f32 %v1495, %v1599
        %v1606 = vlaneseq
        %v1607 = vshrl.u32 %v1606, 7
        %v1608 = vsub.s32 0, %v1607
        %v1609 = vrot.slane %v620, %v1608
        %v1611 = vadd.f32 %v1604, %v1609
        %v1612 = vmax.f32 %v1611, 0.0
        %1613 = vmatprep.subr.bf16.mxu0 0
        %1614 = vmatpush1.bf16.msra.mxu0 %v693
        %1615 = vmatprep.subr.bf16.mxu0 0
        %1616 = vmatpush1.bf16.msra.mxu0 %v692
        %1617 = vmatprep.subr.bf16.mxu0 0
        %1618 = vmatpush1.bf16.msra.mxu0 %v691
        %1619 = vmatprep.subr.bf16.mxu0 0
        %1620 = vmatpush1.bf16.msra.mxu0 %v690
        %1621 = vmatprep.subr.bf16.mxu0 0
        %1622 = vmatpush1.bf16.msra.mxu0 %v689
        %1623 = vmatprep.subr.bf16.mxu0 0
        %1624 = vmatpush1.bf16.msra.mxu0 %v688
        %1625 = vmatprep.subr.bf16.mxu0 0
        %1626 = vmatpush1.bf16.msra.mxu0 %v687
        %1627 = vmatprep.subr.bf16.mxu0 0
        %1628 = vmatpush1.bf16.msra.mxu0 %v686
        %1629 = vmatprep.subr.bf16.mxu0 0
        %1630 = vmatpush2.bf16.msra.mxu0 0
        %1631 = vmatprep.subr.bf16.mxu0 0
        %1632 = vmatpush2.bf16.msra.mxu0 0
        %1633 = vmatprep.subr.bf16.mxu0 0
        %1634 = vmatpush2.bf16.msra.mxu0 0
        %1635 = vmatprep.subr.bf16.mxu0 0
        %1636 = vmatpush2.bf16.msra.mxu0 0
        %1637 = vmatprep.subr.bf16.mxu0 0
        %1638 = vmatpush2.bf16.msra.mxu0 0
        %1639 = vmatprep.subr.bf16.mxu0 0
        %1640 = vmatpush2.bf16.msra.mxu0 0
        %1641 = vmatprep.subr.bf16.mxu0 0
        %1642 = vmatpush2.bf16.msra.mxu0 0
        %1643 = vmatprep.subr.bf16.mxu0 0
        %1644 = vmatpush2.bf16.msra.mxu0 0
        %1645 = vmatprep.mubr.bf16.mxu0 0
        %1646 = vmatmul.mubr.bf16.gmra.mxu0 %v564
        %v1647 = vpop.f32.mrf.mxu0
        %v1648 = vadd.f32 0.0, %v1647
        %v1649 = vpop.f32.mrf.mxu0
        %v1650 = vpop.f32.mrf.mxu0
        %v1651 = vpop.f32.mrf.mxu0
        %1652 = vdwg.mxu0
        %1653 = vmatprep.subr.bf16.mxu0 0
        %1654 = vmatpush1.bf16.msra.mxu0 %v781
        %1655 = vmatprep.subr.bf16.mxu0 0
        %1656 = vmatpush1.bf16.msra.mxu0 %v780
        %1657 = vmatprep.subr.bf16.mxu0 0
        %1658 = vmatpush1.bf16.msra.mxu0 %v779
        %1659 = vmatprep.subr.bf16.mxu0 0
        %1660 = vmatpush1.bf16.msra.mxu0 %v778
        %1661 = vmatprep.subr.bf16.mxu0 0
        %1662 = vmatpush1.bf16.msra.mxu0 %v777
        %1663 = vmatprep.subr.bf16.mxu0 0
        %1664 = vmatpush1.bf16.msra.mxu0 %v776
        %1665 = vmatprep.subr.bf16.mxu0 0
        %1666 = vmatpush1.bf16.msra.mxu0 %v775
        %1667 = vmatprep.subr.bf16.mxu0 0
        %1668 = vmatpush1.bf16.msra.mxu0 %v774
        %1669 = vmatprep.subr.bf16.mxu0 0
        %1670 = vmatpush2.bf16.msra.mxu0 0
        %1671 = vmatprep.subr.bf16.mxu0 0
        %1672 = vmatpush2.bf16.msra.mxu0 0
        %1673 = vmatprep.subr.bf16.mxu0 0
        %1674 = vmatpush2.bf16.msra.mxu0 0
        %1675 = vmatprep.subr.bf16.mxu0 0
        %1676 = vmatpush2.bf16.msra.mxu0 0
        %1677 = vmatprep.subr.bf16.mxu0 0
        %1678 = vmatpush2.bf16.msra.mxu0 0
        %1679 = vmatprep.subr.bf16.mxu0 0
        %1680 = vmatpush2.bf16.msra.mxu0 0
        %1681 = vmatprep.subr.bf16.mxu0 0
        %1682 = vmatpush2.bf16.msra.mxu0 0
        %1683 = vmatprep.subr.bf16.mxu0 0
        %1684 = vmatpush2.bf16.msra.mxu0 0
        %1685 = vmatprep.mubr.bf16.mxu0 0
        %1686 = vmatmul.mubr.bf16.gmra.mxu0 %v509
        %v1687 = vpop.f32.mrf.mxu0
        %v1688 = vadd.f32 %v1648, %v1687
        %v1689 = vpop.f32.mrf.mxu0
        %v1690 = vpop.f32.mrf.mxu0
        %v1691 = vpop.f32.mrf.mxu0
        %1692 = vdwg.mxu0
        %1693 = vmatprep.subr.bf16.mxu0 0
        %1694 = vmatpush1.bf16.msra.mxu0 %v886
        %1695 = vmatprep.subr.bf16.mxu0 0
        %1696 = vmatpush1.bf16.msra.mxu0 %v885
        %1697 = vmatprep.subr.bf16.mxu0 0
        %1698 = vmatpush1.bf16.msra.mxu0 %v884
        %1699 = vmatprep.subr.bf16.mxu0 0
        %1700 = vmatpush1.bf16.msra.mxu0 %v883
        %1701 = vmatprep.subr.bf16.mxu0 0
        %1702 = vmatpush1.bf16.msra.mxu0 %v882
        %1703 = vmatprep.subr.bf16.mxu0 0
        %1704 = vmatpush1.bf16.msra.mxu0 %v881
        %1705 = vmatprep.subr.bf16.mxu0 0
        %1706 = vmatpush1.bf16.msra.mxu0 %v880
        %1707 = vmatprep.subr.bf16.mxu0 0
        %1708 = vmatpush1.bf16.msra.mxu0 %v879
        %1709 = vmatprep.subr.bf16.mxu0 0
        %1710 = vmatpush2.bf16.msra.mxu0 0
        %1711 = vmatprep.subr.bf16.mxu0 0
        %1712 = vmatpush2.bf16.msra.mxu0 0
        %1713 = vmatprep.subr.bf16.mxu0 0
        %1714 = vmatpush2.bf16.msra.mxu0 0
        %1715 = vmatprep.subr.bf16.mxu0 0
        %1716 = vmatpush2.bf16.msra.mxu0 0
        %1717 = vmatprep.subr.bf16.mxu0 0
        %1718 = vmatpush2.bf16.msra.mxu0 0
        %1719 = vmatprep.subr.bf16.mxu0 0
        %1720 = vmatpush2.bf16.msra.mxu0 0
        %1721 = vmatprep.subr.bf16.mxu0 0
        %1722 = vmatpush2.bf16.msra.mxu0 0
        %1723 = vmatprep.subr.bf16.mxu0 0
        %1724 = vmatpush2.bf16.msra.mxu0 0
        %1725 = vmatprep.mubr.bf16.mxu0 0
        %1726 = vmatmul.mubr.bf16.gmra.mxu0 %v619
        %v1727 = vpop.f32.mrf.mxu0
        %v1728 = vadd.f32 0.0, %v1727
        %v1729 = vpop.f32.mrf.mxu0
        %v1730 = vpop.f32.mrf.mxu0
        %v1731 = vpop.f32.mrf.mxu0
        %1732 = vdwg.mxu0
        %v1733 = vadd.f32 %v1688, %v1728
        %1734 = vmatprep.subr.bf16.mxu0 0
        %1735 = vmatpush1.bf16.msra.mxu0 %v1000
        %1736 = vmatprep.subr.bf16.mxu0 0
        %1737 = vmatpush1.bf16.msra.mxu0 %v999
        %1738 = vmatprep.subr.bf16.mxu0 0
        %1739 = vmatpush1.bf16.msra.mxu0 %v998
        %1740 = vmatprep.subr.bf16.mxu0 0
        %1741 = vmatpush1.bf16.msra.mxu0 %v997
        %1742 = vmatprep.subr.bf16.mxu0 0
        %1743 = vmatpush1.bf16.msra.mxu0 %v996
        %1744 = vmatprep.subr.bf16.mxu0 0
        %1745 = vmatpush1.bf16.msra.mxu0 %v995
        %1746 = vmatprep.subr.bf16.mxu0 0
        %1747 = vmatpush1.bf16.msra.mxu0 %v994
        %1748 = vmatprep.subr.bf16.mxu0 0
        %1749 = vmatpush1.bf16.msra.mxu0 %v993
        %1750 = vmatprep.subr.bf16.mxu0 0
        %1751 = vmatpush2.bf16.msra.mxu0 0
        %1752 = vmatprep.subr.bf16.mxu0 0
        %1753 = vmatpush2.bf16.msra.mxu0 0
        %1754 = vmatprep.subr.bf16.mxu0 0
        %1755 = vmatpush2.bf16.msra.mxu0 0
        %1756 = vmatprep.subr.bf16.mxu0 0
        %1757 = vmatpush2.bf16.msra.mxu0 0
        %1758 = vmatprep.subr.bf16.mxu0 0
        %1759 = vmatpush2.bf16.msra.mxu0 0
        %1760 = vmatprep.subr.bf16.mxu0 0
        %1761 = vmatpush2.bf16.msra.mxu0 0
        %1762 = vmatprep.subr.bf16.mxu0 0
        %1763 = vmatpush2.bf16.msra.mxu0 0
        %1764 = vmatprep.subr.bf16.mxu0 0
        %1765 = vmatpush2.bf16.msra.mxu0 0
        %1766 = vmatprep.mubr.bf16.mxu0 0
        %1767 = vmatmul.mubr.bf16.gmra.mxu0 %v1073
        %v1768 = vpop.f32.mrf.mxu0
        %v1769 = vadd.f32 0.0, %v1768
        %v1770 = vpop.f32.mrf.mxu0
        %v1771 = vpop.f32.mrf.mxu0
        %v1772 = vpop.f32.mrf.mxu0
        %1773 = vdwg.mxu0
        %v1774 = vadd.f32 %v1733, %v1769
        %1775 = vmatprep.subr.bf16.mxu0 0
        %1776 = vmatpush1.bf16.msra.mxu0 %v1114
        %1777 = vmatprep.subr.bf16.mxu0 0
        %1778 = vmatpush1.bf16.msra.mxu0 %v1113
        %1779 = vmatprep.subr.bf16.mxu0 0
        %1780 = vmatpush1.bf16.msra.mxu0 %v1112
        %1781 = vmatprep.subr.bf16.mxu0 0
        %1782 = vmatpush1.bf16.msra.mxu0 %v1111
        %1783 = vmatprep.subr.bf16.mxu0 0
        %1784 = vmatpush1.bf16.msra.mxu0 %v1110
        %1785 = vmatprep.subr.bf16.mxu0 0
        %1786 = vmatpush1.bf16.msra.mxu0 %v1109
        %1787 = vmatprep.subr.bf16.mxu0 0
        %1788 = vmatpush1.bf16.msra.mxu0 %v1108
        %1789 = vmatprep.subr.bf16.mxu0 0
        %1790 = vmatpush1.bf16.msra.mxu0 %v1107
        %1791 = vmatprep.subr.bf16.mxu0 0
        %1792 = vmatpush2.bf16.msra.mxu0 0
        %1793 = vmatprep.subr.bf16.mxu0 0
        %1794 = vmatpush2.bf16.msra.mxu0 0
        %1795 = vmatprep.subr.bf16.mxu0 0
        %1796 = vmatpush2.bf16.msra.mxu0 0
        %1797 = vmatprep.subr.bf16.mxu0 0
        %1798 = vmatpush2.bf16.msra.mxu0 0
        %1799 = vmatprep.subr.bf16.mxu0 0
        %1800 = vmatpush2.bf16.msra.mxu0 0
        %1801 = vmatprep.subr.bf16.mxu0 0
        %1802 = vmatpush2.bf16.msra.mxu0 0
        %1803 = vmatprep.subr.bf16.mxu0 0
        %1804 = vmatpush2.bf16.msra.mxu0 0
        %1805 = vmatprep.subr.bf16.mxu0 0
        %1806 = vmatpush2.bf16.msra.mxu0 0
        %1807 = vmatprep.mubr.bf16.mxu0 0
        %1808 = vmatmul.mubr.bf16.gmra.mxu0 %v1187
        %v1809 = vpop.f32.mrf.mxu0
        %v1810 = vadd.f32 0.0, %v1809
        %v1811 = vpop.f32.mrf.mxu0
        %v1812 = vpop.f32.mrf.mxu0
        %v1813 = vpop.f32.mrf.mxu0
        %1814 = vdwg.mxu0
        %v1815 = vadd.f32 %v1774, %v1810
        %v1817 = vshrl.u32 %v619, 16
        %v1819 = vshll.u32 %v619, 16
        %v1821 = vrot.slane %v1819, 1
        %v1822 = vor.u32 %v1817, %v1821
        %1824 = vmatprep.subr.bf16.mxu0 0
        %1825 = vmatpush1.bf16.msra.mxu0 %v1228
        %1826 = vmatprep.subr.bf16.mxu0 0
        %1827 = vmatpush1.bf16.msra.mxu0 %v1227
        %1828 = vmatprep.subr.bf16.mxu0 0
        %1829 = vmatpush1.bf16.msra.mxu0 %v1226
        %1830 = vmatprep.subr.bf16.mxu0 0
        %1831 = vmatpush1.bf16.msra.mxu0 %v1225
        %1832 = vmatprep.subr.bf16.mxu0 0
        %1833 = vmatpush1.bf16.msra.mxu0 %v1224
        %1834 = vmatprep.subr.bf16.mxu0 0
        %1835 = vmatpush1.bf16.msra.mxu0 %v1223
        %1836 = vmatprep.subr.bf16.mxu0 0
        %1837 = vmatpush1.bf16.msra.mxu0 %v1222
        %1838 = vmatprep.subr.bf16.mxu0 0
        %1839 = vmatpush1.bf16.msra.mxu0 %v1221
        %1840 = vmatprep.subr.bf16.mxu0 0
        %1841 = vmatpush2.bf16.msra.mxu0 0
        %1842 = vmatprep.subr.bf16.mxu0 0
        %1843 = vmatpush2.bf16.msra.mxu0 0
        %1844 = vmatprep.subr.bf16.mxu0 0
        %1845 = vmatpush2.bf16.msra.mxu0 0
        %1846 = vmatprep.subr.bf16.mxu0 0
        %1847 = vmatpush2.bf16.msra.mxu0 0
        %1848 = vmatprep.subr.bf16.mxu0 0
        %1849 = vmatpush2.bf16.msra.mxu0 0
        %1850 = vmatprep.subr.bf16.mxu0 0
        %1851 = vmatpush2.bf16.msra.mxu0 0
        %1852 = vmatprep.subr.bf16.mxu0 0
        %1853 = vmatpush2.bf16.msra.mxu0 0
        %1854 = vmatprep.subr.bf16.mxu0 0
        %1855 = vmatpush2.bf16.msra.mxu0 0
        %1856 = vmatprep.mubr.bf16.mxu0 0
        %1857 = vmatmul.mubr.bf16.gmra.mxu0 %v1822
        %v1858 = vpop.f32.mrf.mxu0
        %v1859 = vadd.f32 0.0, %v1858
        %v1860 = vpop.f32.mrf.mxu0
        %v1861 = vpop.f32.mrf.mxu0
        %v1862 = vpop.f32.mrf.mxu0
        %1863 = vdwg.mxu0
        %v1864 = vadd.f32 %v1815, %v1859
        %1865 = vmatprep.subr.bf16.mxu0 0
        %1866 = vmatpush1.bf16.msra.mxu0 %v1337
        %1867 = vmatprep.subr.bf16.mxu0 0
        %1868 = vmatpush1.bf16.msra.mxu0 %v1336
        %1869 = vmatprep.subr.bf16.mxu0 0
        %1870 = vmatpush1.bf16.msra.mxu0 %v1335
        %1871 = vmatprep.subr.bf16.mxu0 0
        %1872 = vmatpush1.bf16.msra.mxu0 %v1334
        %1873 = vmatprep.subr.bf16.mxu0 0
        %1874 = vmatpush1.bf16.msra.mxu0 %v1333
        %1875 = vmatprep.subr.bf16.mxu0 0
        %1876 = vmatpush1.bf16.msra.mxu0 %v1332
        %1877 = vmatprep.subr.bf16.mxu0 0
        %1878 = vmatpush1.bf16.msra.mxu0 %v1331
        %1879 = vmatprep.subr.bf16.mxu0 0
        %1880 = vmatpush1.bf16.msra.mxu0 %v1330
        %1881 = vmatprep.subr.bf16.mxu0 0
        %1882 = vmatpush2.bf16.msra.mxu0 0
        %1883 = vmatprep.subr.bf16.mxu0 0
        %1884 = vmatpush2.bf16.msra.mxu0 0
        %1885 = vmatprep.subr.bf16.mxu0 0
        %1886 = vmatpush2.bf16.msra.mxu0 0
        %1887 = vmatprep.subr.bf16.mxu0 0
        %1888 = vmatpush2.bf16.msra.mxu0 0
        %1889 = vmatprep.subr.bf16.mxu0 0
        %1890 = vmatpush2.bf16.msra.mxu0 0
        %1891 = vmatprep.subr.bf16.mxu0 0
        %1892 = vmatpush2.bf16.msra.mxu0 0
        %1893 = vmatprep.subr.bf16.mxu0 0
        %1894 = vmatpush2.bf16.msra.mxu0 0
        %1895 = vmatprep.subr.bf16.mxu0 0
        %1896 = vmatpush2.bf16.msra.mxu0 0
        %1897 = vmatprep.mubr.bf16.mxu0 0
        %1898 = vmatmul.mubr.bf16.gmra.mxu0 %v1405
        %v1899 = vpop.f32.mrf.mxu0
        %v1900 = vadd.f32 0.0, %v1899
        %v1901 = vpop.f32.mrf.mxu0
        %v1902 = vpop.f32.mrf.mxu0
        %v1903 = vpop.f32.mrf.mxu0
        %1904 = vdwg.mxu0
        %v1905 = vadd.f32 %v1864, %v1900
        %1906 = vmatprep.subr.bf16.mxu0 0
        %1907 = vmatpush1.bf16.msra.mxu0 %v1446
        %1908 = vmatprep.subr.bf16.mxu0 0
        %1909 = vmatpush1.bf16.msra.mxu0 %v1445
        %1910 = vmatprep.subr.bf16.mxu0 0
        %1911 = vmatpush1.bf16.msra.mxu0 %v1444
        %1912 = vmatprep.subr.bf16.mxu0 0
        %1913 = vmatpush1.bf16.msra.mxu0 %v1443
        %1914 = vmatprep.subr.bf16.mxu0 0
        %1915 = vmatpush1.bf16.msra.mxu0 %v1442
        %1916 = vmatprep.subr.bf16.mxu0 0
        %1917 = vmatpush1.bf16.msra.mxu0 %v1441
        %1918 = vmatprep.subr.bf16.mxu0 0
        %1919 = vmatpush1.bf16.msra.mxu0 %v1440
        %1920 = vmatprep.subr.bf16.mxu0 0
        %1921 = vmatpush1.bf16.msra.mxu0 %v1439
        %1922 = vmatprep.subr.bf16.mxu0 0
        %1923 = vmatpush2.bf16.msra.mxu0 0
        %1924 = vmatprep.subr.bf16.mxu0 0
        %1925 = vmatpush2.bf16.msra.mxu0 0
        %1926 = vmatprep.subr.bf16.mxu0 0
        %1927 = vmatpush2.bf16.msra.mxu0 0
        %1928 = vmatprep.subr.bf16.mxu0 0
        %1929 = vmatpush2.bf16.msra.mxu0 0
        %1930 = vmatprep.subr.bf16.mxu0 0
        %1931 = vmatpush2.bf16.msra.mxu0 0
        %1932 = vmatprep.subr.bf16.mxu0 0
        %1933 = vmatpush2.bf16.msra.mxu0 0
        %1934 = vmatprep.subr.bf16.mxu0 0
        %1935 = vmatpush2.bf16.msra.mxu0 0
        %1936 = vmatprep.subr.bf16.mxu0 0
        %1937 = vmatpush2.bf16.msra.mxu0 0
        %1938 = vmatprep.mubr.bf16.mxu0 0
        %1939 = vmatmul.mubr.bf16.gmra.mxu0 %v1514
        %v1940 = vpop.f32.mrf.mxu0
        %v1941 = vadd.f32 0.0, %v1940
        %v1942 = vpop.f32.mrf.mxu0
        %v1943 = vpop.f32.mrf.mxu0
        %v1944 = vpop.f32.mrf.mxu0
        %1945 = vdwg.mxu0
        %v1946 = vadd.f32 %v1905, %v1941
        %v1948 = vrot.slane %v619, 1
        %1950 = vmatprep.subr.bf16.mxu0 0
        %1951 = vmatpush1.bf16.msra.mxu0 %v1555
        %1952 = vmatprep.subr.bf16.mxu0 0
        %1953 = vmatpush1.bf16.msra.mxu0 %v1554
        %1954 = vmatprep.subr.bf16.mxu0 0
        %1955 = vmatpush1.bf16.msra.mxu0 %v1553
        %1956 = vmatprep.subr.bf16.mxu0 0
        %1957 = vmatpush1.bf16.msra.mxu0 %v1552
        %1958 = vmatprep.subr.bf16.mxu0 0
        %1959 = vmatpush1.bf16.msra.mxu0 %v1551
        %1960 = vmatprep.subr.bf16.mxu0 0
        %1961 = vmatpush1.bf16.msra.mxu0 %v1550
        %1962 = vmatprep.subr.bf16.mxu0 0
        %1963 = vmatpush1.bf16.msra.mxu0 %v1549
        %1964 = vmatprep.subr.bf16.mxu0 0
        %1965 = vmatpush1.bf16.msra.mxu0 %v1548
        %1966 = vmatprep.subr.bf16.mxu0 0
        %1967 = vmatpush2.bf16.msra.mxu0 0
        %1968 = vmatprep.subr.bf16.mxu0 0
        %1969 = vmatpush2.bf16.msra.mxu0 0
        %1970 = vmatprep.subr.bf16.mxu0 0
        %1971 = vmatpush2.bf16.msra.mxu0 0
        %1972 = vmatprep.subr.bf16.mxu0 0
        %1973 = vmatpush2.bf16.msra.mxu0 0
        %1974 = vmatprep.subr.bf16.mxu0 0
        %1975 = vmatpush2.bf16.msra.mxu0 0
        %1976 = vmatprep.subr.bf16.mxu0 0
        %1977 = vmatpush2.bf16.msra.mxu0 0
        %1978 = vmatprep.subr.bf16.mxu0 0
        %1979 = vmatpush2.bf16.msra.mxu0 0
        %1980 = vmatprep.subr.bf16.mxu0 0
        %1981 = vmatpush2.bf16.msra.mxu0 0
        %1982 = vmatprep.mubr.bf16.mxu0 0
        %1983 = vmatmul.mubr.bf16.gmra.mxu0 %v1948
        %v1984 = vpop.f32.mrf.mxu0
        %v1985 = vadd.f32 0.0, %v1984
        %v1986 = vpop.f32.mrf.mxu0
        %v1987 = vpop.f32.mrf.mxu0
        %v1988 = vpop.f32.mrf.mxu0
        %1989 = vdwg.mxu0
        %v1990 = vadd.f32 %v1946, %v1985
        %v1991 = vadd.f32 %v1990, %v1609
        %v1992 = vmax.f32 %v1991, 0.0
        %v1993 = vld [vmem:[%s6] sm:$0x1]
        %v1994 = vmax.f32 %v1612, %v1992
        %v1996 = vrot.slane %v1994, 1
        %v1998 = vmax.f32 %v1994, %v1996
        %v1999 = vpack.c.bf16 %v1998, %v1998
        %v2000 = vld [vmem:[%s5] sm:$0xf]
        %v2001 = vld [vmem:[%s5 + $0x4] sm:$0xf]
        %v2002 = vld [vmem:[%s5 + $0x8] sm:$0xf]
        %v2003 = vld [vmem:[%s5 + $0xc] sm:$0xf]
        %v2004 = vld [vmem:[%s5 + $0x10] sm:$0xf]
        %v2005 = vld [vmem:[%s5 + $0x14] sm:$0xf]
        %v2006 = vld [vmem:[%s5 + $0x18] sm:$0xf]
        %v2007 = vld [vmem:[%s5 + $0x1c] sm:$0xf]
        %v2008 = vld [vmem:[%s5 + $0x20] sm:$0xf]
        %v2009 = vld [vmem:[%s5 + $0x24] sm:$0xf]
        %v2010 = vld [vmem:[%s5 + $0x28] sm:$0xf]
        %v2011 = vld [vmem:[%s5 + $0x2c] sm:$0xf]
        %v2012 = vld [vmem:[%s5 + $0x30] sm:$0xf]
        %v2013 = vld [vmem:[%s5 + $0x34] sm:$0xf]
        %v2014 = vld [vmem:[%s5 + $0x38] sm:$0xf]
        %v2015 = vld [vmem:[%s5 + $0x3c] sm:$0xf]
        %v2032 = vunpack.c.l.b16 %v2000
        %v2033 = vunpack.c.l.b16 %v2001
        %v2034 = vunpack.c.l.b16 %v2002
        %v2035 = vunpack.c.l.b16 %v2003
        %v2036 = vunpack.c.l.b16 %v2004
        %v2037 = vunpack.c.l.b16 %v2005
        %v2038 = vunpack.c.l.b16 %v2006
        %v2039 = vunpack.c.l.b16 %v2007
        %v2040 = vunpack.c.l.b16 %v2008
        %v2041 = vunpack.c.l.b16 %v2009
        %v2042 = vunpack.c.l.b16 %v2010
        %v2043 = vunpack.c.l.b16 %v2011
        %v2044 = vunpack.c.l.b16 %v2012
        %v2045 = vunpack.c.l.b16 %v2013
        %v2046 = vunpack.c.l.b16 %v2014
        %v2047 = vunpack.c.l.b16 %v2015
        %v2048 = vpack.c.b16 %v2033, %v2032
        %v2049 = vpack.c.b16 %v2035, %v2034
        %v2050 = vpack.c.b16 %v2037, %v2036
        %v2051 = vpack.c.b16 %v2039, %v2038
        %v2052 = vpack.c.b16 %v2041, %v2040
        %v2053 = vpack.c.b16 %v2043, %v2042
        %v2054 = vpack.c.b16 %v2045, %v2044
        %v2055 = vpack.c.b16 %v2047, %v2046
        %2064 = vmatprep.subr.bf16.mxu0 0
        %2065 = vmatpush1.bf16.msra.mxu0 %v2055
        %2066 = vmatprep.subr.bf16.mxu0 0
        %2067 = vmatpush1.bf16.msra.mxu0 %v2054
        %2068 = vmatprep.subr.bf16.mxu0 0
        %2069 = vmatpush1.bf16.msra.mxu0 %v2053
        %2070 = vmatprep.subr.bf16.mxu0 0
        %2071 = vmatpush1.bf16.msra.mxu0 %v2052
        %2072 = vmatprep.subr.bf16.mxu0 0
        %2073 = vmatpush1.bf16.msra.mxu0 %v2051
        %2074 = vmatprep.subr.bf16.mxu0 0
        %2075 = vmatpush1.bf16.msra.mxu0 %v2050
        %2076 = vmatprep.subr.bf16.mxu0 0
        %2077 = vmatpush1.bf16.msra.mxu0 %v2049
        %2078 = vmatprep.subr.bf16.mxu0 0
        %2079 = vmatpush1.bf16.msra.mxu0 %v2048
        %2080 = vmatprep.subr.bf16.mxu0 0
        %2081 = vmatpush2.bf16.msra.mxu0 0
        %2082 = vmatprep.subr.bf16.mxu0 0
        %2083 = vmatpush2.bf16.msra.mxu0 0
        %2084 = vmatprep.subr.bf16.mxu0 0
        %2085 = vmatpush2.bf16.msra.mxu0 0
        %2086 = vmatprep.subr.bf16.mxu0 0
        %2087 = vmatpush2.bf16.msra.mxu0 0
        %2088 = vmatprep.subr.bf16.mxu0 0
        %2089 = vmatpush2.bf16.msra.mxu0 0
        %2090 = vmatprep.subr.bf16.mxu0 0
        %2091 = vmatpush2.bf16.msra.mxu0 0
        %2092 = vmatprep.subr.bf16.mxu0 0
        %2093 = vmatpush2.bf16.msra.mxu0 0
        %2094 = vmatprep.subr.bf16.mxu0 0
        %2095 = vmatpush2.bf16.msra.mxu0 0
        %2096 = vmatprep.mubr.bf16.mxu0 0
        %2097 = vmatmul.mubr.bf16.gmra.mxu0 %v1999
        %v2098 = vpop.f32.mrf.mxu0
        %v2099 = vadd.f32 0.0, %v2098
        %v2100 = vpop.f32.mrf.mxu0
        %v2101 = vpop.f32.mrf.mxu0
        %v2102 = vpop.f32.mrf.mxu0
        %2103 = vdwg.mxu0
        %v2104 = vadd.f32 %v1993, %v2099
        %s2105 = scalar_lea.vmem %s5, 64
        %v2106 = vld [vmem:[%s2105] sm:$0xf]
        %v2107 = vld [vmem:[%s2105 + $0x4] sm:$0xf]
        %v2108 = vld [vmem:[%s2105 + $0x8] sm:$0xf]
        %v2109 = vld [vmem:[%s2105 + $0xc] sm:$0xf]
        %v2110 = vld [vmem:[%s2105 + $0x10] sm:$0xf]
        %v2111 = vld [vmem:[%s2105 + $0x14] sm:$0xf]
        %v2112 = vld [vmem:[%s2105 + $0x18] sm:$0xf]
        %v2113 = vld [vmem:[%s2105 + $0x1c] sm:$0xf]
        %v2114 = vld [vmem:[%s2105 + $0x20] sm:$0xf]
        %v2115 = vld [vmem:[%s2105 + $0x24] sm:$0xf]
        %v2116 = vld [vmem:[%s2105 + $0x28] sm:$0xf]
        %v2117 = vld [vmem:[%s2105 + $0x2c] sm:$0xf]
        %v2118 = vld [vmem:[%s2105 + $0x30] sm:$0xf]
        %v2119 = vld [vmem:[%s2105 + $0x34] sm:$0xf]
        %v2120 = vld [vmem:[%s2105 + $0x38] sm:$0xf]
        %v2121 = vld [vmem:[%s2105 + $0x3c] sm:$0xf]
        %v2123 = vrot.slane %v1999, 1
        %v2141 = vunpack.c.l.b16 %v2106
        %v2142 = vunpack.c.l.b16 %v2107
        %v2143 = vunpack.c.l.b16 %v2108
        %v2144 = vunpack.c.l.b16 %v2109
        %v2145 = vunpack.c.l.b16 %v2110
        %v2146 = vunpack.c.l.b16 %v2111
        %v2147 = vunpack.c.l.b16 %v2112
        %v2148 = vunpack.c.l.b16 %v2113
        %v2149 = vunpack.c.l.b16 %v2114
        %v2150 = vunpack.c.l.b16 %v2115
        %v2151 = vunpack.c.l.b16 %v2116
        %v2152 = vunpack.c.l.b16 %v2117
        %v2153 = vunpack.c.l.b16 %v2118
        %v2154 = vunpack.c.l.b16 %v2119
        %v2155 = vunpack.c.l.b16 %v2120
        %v2156 = vunpack.c.l.b16 %v2121
        %v2157 = vpack.c.b16 %v2142, %v2141
        %v2158 = vpack.c.b16 %v2144, %v2143
        %v2159 = vpack.c.b16 %v2146, %v2145
        %v2160 = vpack.c.b16 %v2148, %v2147
        %v2161 = vpack.c.b16 %v2150, %v2149
        %v2162 = vpack.c.b16 %v2152, %v2151
        %v2163 = vpack.c.b16 %v2154, %v2153
        %v2164 = vpack.c.b16 %v2156, %v2155
        %2173 = vmatprep.subr.bf16.mxu0 0
        %2174 = vmatpush1.bf16.msra.mxu0 %v2164
        %2175 = vmatprep.subr.bf16.mxu0 0
        %2176 = vmatpush1.bf16.msra.mxu0 %v2163
        %2177 = vmatprep.subr.bf16.mxu0 0
        %2178 = vmatpush1.bf16.msra.mxu0 %v2162
        %2179 = vmatprep.subr.bf16.mxu0 0
        %2180 = vmatpush1.bf16.msra.mxu0 %v2161
        %2181 = vmatprep.subr.bf16.mxu0 0
        %2182 = vmatpush1.bf16.msra.mxu0 %v2160
        %2183 = vmatprep.subr.bf16.mxu0 0
        %2184 = vmatpush1.bf16.msra.mxu0 %v2159
        %2185 = vmatprep.subr.bf16.mxu0 0
        %2186 = vmatpush1.bf16.msra.mxu0 %v2158
        %2187 = vmatprep.subr.bf16.mxu0 0
        %2188 = vmatpush1.bf16.msra.mxu0 %v2157
        %2189 = vmatprep.subr.bf16.mxu0 0
        %2190 = vmatpush2.bf16.msra.mxu0 0
        %2191 = vmatprep.subr.bf16.mxu0 0
        %2192 = vmatpush2.bf16.msra.mxu0 0
        %2193 = vmatprep.subr.bf16.mxu0 0
        %2194 = vmatpush2.bf16.msra.mxu0 0
        %2195 = vmatprep.subr.bf16.mxu0 0
        %2196 = vmatpush2.bf16.msra.mxu0 0
        %2197 = vmatprep.subr.bf16.mxu0 0
        %2198 = vmatpush2.bf16.msra.mxu0 0
        %2199 = vmatprep.subr.bf16.mxu0 0
        %2200 = vmatpush2.bf16.msra.mxu0 0
        %2201 = vmatprep.subr.bf16.mxu0 0
        %2202 = vmatpush2.bf16.msra.mxu0 0
        %2203 = vmatprep.subr.bf16.mxu0 0
        %2204 = vmatpush2.bf16.msra.mxu0 0
        %2205 = vmatprep.mubr.bf16.mxu0 0
        %2206 = vmatmul.mubr.bf16.gmra.mxu0 %v2123
        %v2207 = vpop.f32.mrf.mxu0
        %v2208 = vadd.f32 0.0, %v2207
        %v2209 = vpop.f32.mrf.mxu0
        %v2210 = vpop.f32.mrf.mxu0
        %v2211 = vpop.f32.mrf.mxu0
        %2212 = vdwg.mxu0
        %v2213 = vadd.f32 %v2104, %v2208
        %s2214 = scalar_lea.vmem %s5, 128
        %v2215 = vld [vmem:[%s2214] sm:$0xf]
        %v2216 = vld [vmem:[%s2214 + $0x4] sm:$0xf]
        %v2217 = vld [vmem:[%s2214 + $0x8] sm:$0xf]
        %v2218 = vld [vmem:[%s2214 + $0xc] sm:$0xf]
        %v2219 = vld [vmem:[%s2214 + $0x10] sm:$0xf]
        %v2220 = vld [vmem:[%s2214 + $0x14] sm:$0xf]
        %v2221 = vld [vmem:[%s2214 + $0x18] sm:$0xf]
        %v2222 = vld [vmem:[%s2214 + $0x1c] sm:$0xf]
        %v2223 = vld [vmem:[%s2214 + $0x20] sm:$0xf]
        %v2224 = vld [vmem:[%s2214 + $0x24] sm:$0xf]
        %v2225 = vld [vmem:[%s2214 + $0x28] sm:$0xf]
        %v2226 = vld [vmem:[%s2214 + $0x2c] sm:$0xf]
        %v2227 = vld [vmem:[%s2214 + $0x30] sm:$0xf]
        %v2228 = vld [vmem:[%s2214 + $0x34] sm:$0xf]
        %v2229 = vld [vmem:[%s2214 + $0x38] sm:$0xf]
        %v2230 = vld [vmem:[%s2214 + $0x3c] sm:$0xf]
        %v2231 = vrot.slane %v1999, 2
        %v2249 = vunpack.c.l.b16 %v2215
        %v2250 = vunpack.c.l.b16 %v2216
        %v2251 = vunpack.c.l.b16 %v2217
        %v2252 = vunpack.c.l.b16 %v2218
        %v2253 = vunpack.c.l.b16 %v2219
        %v2254 = vunpack.c.l.b16 %v2220
        %v2255 = vunpack.c.l.b16 %v2221
        %v2256 = vunpack.c.l.b16 %v2222
        %v2257 = vunpack.c.l.b16 %v2223
        %v2258 = vunpack.c.l.b16 %v2224
        %v2259 = vunpack.c.l.b16 %v2225
        %v2260 = vunpack.c.l.b16 %v2226
        %v2261 = vunpack.c.l.b16 %v2227
        %v2262 = vunpack.c.l.b16 %v2228
        %v2263 = vunpack.c.l.b16 %v2229
        %v2264 = vunpack.c.l.b16 %v2230
        %v2265 = vpack.c.b16 %v2250, %v2249
        %v2266 = vpack.c.b16 %v2252, %v2251
        %v2267 = vpack.c.b16 %v2254, %v2253
        %v2268 = vpack.c.b16 %v2256, %v2255
        %v2269 = vpack.c.b16 %v2258, %v2257
        %v2270 = vpack.c.b16 %v2260, %v2259
        %v2271 = vpack.c.b16 %v2262, %v2261
        %v2272 = vpack.c.b16 %v2264, %v2263
        %2281 = vmatprep.subr.bf16.mxu0 0
        %2282 = vmatpush1.bf16.msra.mxu0 %v2272
        %2283 = vmatprep.subr.bf16.mxu0 0
        %2284 = vmatpush1.bf16.msra.mxu0 %v2271
        %2285 = vmatprep.subr.bf16.mxu0 0
        %2286 = vmatpush1.bf16.msra.mxu0 %v2270
        %2287 = vmatprep.subr.bf16.mxu0 0
        %2288 = vmatpush1.bf16.msra.mxu0 %v2269
        %2289 = vmatprep.subr.bf16.mxu0 0
        %2290 = vmatpush1.bf16.msra.mxu0 %v2268
        %2291 = vmatprep.subr.bf16.mxu0 0
        %2292 = vmatpush1.bf16.msra.mxu0 %v2267
        %2293 = vmatprep.subr.bf16.mxu0 0
        %2294 = vmatpush1.bf16.msra.mxu0 %v2266
        %2295 = vmatprep.subr.bf16.mxu0 0
        %2296 = vmatpush1.bf16.msra.mxu0 %v2265
        %2297 = vmatprep.subr.bf16.mxu0 0
        %2298 = vmatpush2.bf16.msra.mxu0 0
        %2299 = vmatprep.subr.bf16.mxu0 0
        %2300 = vmatpush2.bf16.msra.mxu0 0
        %2301 = vmatprep.subr.bf16.mxu0 0
        %2302 = vmatpush2.bf16.msra.mxu0 0
        %2303 = vmatprep.subr.bf16.mxu0 0
        %2304 = vmatpush2.bf16.msra.mxu0 0
        %2305 = vmatprep.subr.bf16.mxu0 0
        %2306 = vmatpush2.bf16.msra.mxu0 0
        %2307 = vmatprep.subr.bf16.mxu0 0
        %2308 = vmatpush2.bf16.msra.mxu0 0
        %2309 = vmatprep.subr.bf16.mxu0 0
        %2310 = vmatpush2.bf16.msra.mxu0 0
        %2311 = vmatprep.subr.bf16.mxu0 0
        %2312 = vmatpush2.bf16.msra.mxu0 0
        %2313 = vmatprep.mubr.bf16.mxu0 0
        %2314 = vmatmul.mubr.bf16.gmra.mxu0 %v2231
        %v2315 = vpop.f32.mrf.mxu0
        %v2316 = vadd.f32 0.0, %v2315
        %v2317 = vpop.f32.mrf.mxu0
        %v2318 = vpop.f32.mrf.mxu0
        %v2319 = vpop.f32.mrf.mxu0
        %2320 = vdwg.mxu0
        %v2321 = vadd.f32 %v2213, %v2316
        %s2322 = scalar_lea.vmem %s5, 192
        %v2323 = vld [vmem:[%s2322] sm:$0xf]
        %v2324 = vld [vmem:[%s2322 + $0x4] sm:$0xf]
        %v2325 = vld [vmem:[%s2322 + $0x8] sm:$0xf]
        %v2326 = vld [vmem:[%s2322 + $0xc] sm:$0xf]
        %v2327 = vld [vmem:[%s2322 + $0x10] sm:$0xf]
        %v2328 = vld [vmem:[%s2322 + $0x14] sm:$0xf]
        %v2329 = vld [vmem:[%s2322 + $0x18] sm:$0xf]
        %v2330 = vld [vmem:[%s2322 + $0x1c] sm:$0xf]
        %v2331 = vld [vmem:[%s2322 + $0x20] sm:$0xf]
        %v2332 = vld [vmem:[%s2322 + $0x24] sm:$0xf]
        %v2333 = vld [vmem:[%s2322 + $0x28] sm:$0xf]
        %v2334 = vld [vmem:[%s2322 + $0x2c] sm:$0xf]
        %v2335 = vld [vmem:[%s2322 + $0x30] sm:$0xf]
        %v2336 = vld [vmem:[%s2322 + $0x34] sm:$0xf]
        %v2337 = vld [vmem:[%s2322 + $0x38] sm:$0xf]
        %v2338 = vld [vmem:[%s2322 + $0x3c] sm:$0xf]
        %v2339 = vrot.slane %v1999, 3
        %v2357 = vunpack.c.l.b16 %v2323
        %v2358 = vunpack.c.l.b16 %v2324
        %v2359 = vunpack.c.l.b16 %v2325
        %v2360 = vunpack.c.l.b16 %v2326
        %v2361 = vunpack.c.l.b16 %v2327
        %v2362 = vunpack.c.l.b16 %v2328
        %v2363 = vunpack.c.l.b16 %v2329
        %v2364 = vunpack.c.l.b16 %v2330
        %v2365 = vunpack.c.l.b16 %v2331
        %v2366 = vunpack.c.l.b16 %v2332
        %v2367 = vunpack.c.l.b16 %v2333
        %v2368 = vunpack.c.l.b16 %v2334
        %v2369 = vunpack.c.l.b16 %v2335
        %v2370 = vunpack.c.l.b16 %v2336
        %v2371 = vunpack.c.l.b16 %v2337
        %v2372 = vunpack.c.l.b16 %v2338
        %v2373 = vpack.c.b16 %v2358, %v2357
        %v2374 = vpack.c.b16 %v2360, %v2359
        %v2375 = vpack.c.b16 %v2362, %v2361
        %v2376 = vpack.c.b16 %v2364, %v2363
        %v2377 = vpack.c.b16 %v2366, %v2365
        %v2378 = vpack.c.b16 %v2368, %v2367
        %v2379 = vpack.c.b16 %v2370, %v2369
        %v2380 = vpack.c.b16 %v2372, %v2371
        %2389 = vmatprep.subr.bf16.mxu0 0
        %2390 = vmatpush1.bf16.msra.mxu0 %v2380
        %2391 = vmatprep.subr.bf16.mxu0 0
        %2392 = vmatpush1.bf16.msra.mxu0 %v2379
        %2393 = vmatprep.subr.bf16.mxu0 0
        %2394 = vmatpush1.bf16.msra.mxu0 %v2378
        %2395 = vmatprep.subr.bf16.mxu0 0
        %2396 = vmatpush1.bf16.msra.mxu0 %v2377
        %2397 = vmatprep.subr.bf16.mxu0 0
        %2398 = vmatpush1.bf16.msra.mxu0 %v2376
        %2399 = vmatprep.subr.bf16.mxu0 0
        %2400 = vmatpush1.bf16.msra.mxu0 %v2375
        %2401 = vmatprep.subr.bf16.mxu0 0
        %2402 = vmatpush1.bf16.msra.mxu0 %v2374
        %2403 = vmatprep.subr.bf16.mxu0 0
        %2404 = vmatpush1.bf16.msra.mxu0 %v2373
        %2405 = vmatprep.subr.bf16.mxu0 0
        %2406 = vmatpush2.bf16.msra.mxu0 0
        %2407 = vmatprep.subr.bf16.mxu0 0
        %2408 = vmatpush2.bf16.msra.mxu0 0
        %2409 = vmatprep.subr.bf16.mxu0 0
        %2410 = vmatpush2.bf16.msra.mxu0 0
        %2411 = vmatprep.subr.bf16.mxu0 0
        %2412 = vmatpush2.bf16.msra.mxu0 0
        %2413 = vmatprep.subr.bf16.mxu0 0
        %2414 = vmatpush2.bf16.msra.mxu0 0
        %2415 = vmatprep.subr.bf16.mxu0 0
        %2416 = vmatpush2.bf16.msra.mxu0 0
        %2417 = vmatprep.subr.bf16.mxu0 0
        %2418 = vmatpush2.bf16.msra.mxu0 0
        %2419 = vmatprep.subr.bf16.mxu0 0
        %2420 = vmatpush2.bf16.msra.mxu0 0
        %2421 = vmatprep.mubr.bf16.mxu0 0
        %2422 = vmatmul.mubr.bf16.gmra.mxu0 %v2339
        %v2423 = vpop.f32.mrf.mxu0
        %v2424 = vadd.f32 0.0, %v2423
        %v2425 = vpop.f32.mrf.mxu0
        %v2426 = vpop.f32.mrf.mxu0
        %v2427 = vpop.f32.mrf.mxu0
        %2428 = vdwg.mxu0
        %v2429 = vadd.f32 %v2321, %v2424
        %v2430 = vmax.f32 %v2429, 0.0
        %v2431 = vpack.c.bf16 %v2430, %v2430
        %v2432 = vld [vmem:[%s7] sm:$0xf]
        %v2433 = vld [vmem:[%s7 + $0x4] sm:$0xf]
        %v2434 = vld [vmem:[%s7 + $0x8] sm:$0xf]
        %v2435 = vld [vmem:[%s7 + $0xc] sm:$0xf]
        %v2436 = vld [vmem:[%s7 + $0x10] sm:$0xf]
        %v2437 = vld [vmem:[%s7 + $0x14] sm:$0xf]
        %v2438 = vld [vmem:[%s7 + $0x18] sm:$0xf]
        %v2439 = vld [vmem:[%s7 + $0x1c] sm:$0xf]
        %v2440 = vld [vmem:[%s7 + $0x20] sm:$0xf]
        %v2441 = vld [vmem:[%s7 + $0x24] sm:$0xf]
        %v2442 = vld [vmem:[%s7 + $0x28] sm:$0xf]
        %v2443 = vld [vmem:[%s7 + $0x2c] sm:$0xf]
        %v2444 = vld [vmem:[%s7 + $0x30] sm:$0xf]
        %v2445 = vld [vmem:[%s7 + $0x34] sm:$0xf]
        %v2446 = vld [vmem:[%s7 + $0x38] sm:$0xf]
        %v2447 = vld [vmem:[%s7 + $0x3c] sm:$0xf]
        %v2448 = vld [vmem:[%s8] sm:$0x1]
        %v2465 = vunpack.c.l.b16 %v2432
        %v2466 = vunpack.c.l.b16 %v2433
        %v2467 = vunpack.c.l.b16 %v2434
        %v2468 = vunpack.c.l.b16 %v2435
        %v2469 = vunpack.c.l.b16 %v2436
        %v2470 = vunpack.c.l.b16 %v2437
        %v2471 = vunpack.c.l.b16 %v2438
        %v2472 = vunpack.c.l.b16 %v2439
        %v2473 = vunpack.c.l.b16 %v2440
        %v2474 = vunpack.c.l.b16 %v2441
        %v2475 = vunpack.c.l.b16 %v2442
        %v2476 = vunpack.c.l.b16 %v2443
        %v2477 = vunpack.c.l.b16 %v2444
        %v2478 = vunpack.c.l.b16 %v2445
        %v2479 = vunpack.c.l.b16 %v2446
        %v2480 = vunpack.c.l.b16 %v2447
        %v2481 = vpack.c.b16 %v2466, %v2465
        %v2482 = vpack.c.b16 %v2468, %v2467
        %v2483 = vpack.c.b16 %v2470, %v2469
        %v2484 = vpack.c.b16 %v2472, %v2471
        %v2485 = vpack.c.b16 %v2474, %v2473
        %v2486 = vpack.c.b16 %v2476, %v2475
        %v2487 = vpack.c.b16 %v2478, %v2477
        %v2488 = vpack.c.b16 %v2480, %v2479
        %2497 = vmatprep.subr.bf16.mxu0 0
        %2498 = vmatpush1.bf16.msra.mxu0 %v2488
        %2499 = vmatprep.subr.bf16.mxu0 0
        %2500 = vmatpush1.bf16.msra.mxu0 %v2487
        %2501 = vmatprep.subr.bf16.mxu0 0
        %2502 = vmatpush1.bf16.msra.mxu0 %v2486
        %2503 = vmatprep.subr.bf16.mxu0 0
        %2504 = vmatpush1.bf16.msra.mxu0 %v2485
        %2505 = vmatprep.subr.bf16.mxu0 0
        %2506 = vmatpush1.bf16.msra.mxu0 %v2484
        %2507 = vmatprep.subr.bf16.mxu0 0
        %2508 = vmatpush1.bf16.msra.mxu0 %v2483
        %2509 = vmatprep.subr.bf16.mxu0 0
        %2510 = vmatpush1.bf16.msra.mxu0 %v2482
        %2511 = vmatprep.subr.bf16.mxu0 0
        %2512 = vmatpush1.bf16.msra.mxu0 %v2481
        %2513 = vmatprep.subr.bf16.mxu0 0
        %2514 = vmatpush2.bf16.msra.mxu0 0
        %2515 = vmatprep.subr.bf16.mxu0 0
        %2516 = vmatpush2.bf16.msra.mxu0 0
        %2517 = vmatprep.subr.bf16.mxu0 0
        %2518 = vmatpush2.bf16.msra.mxu0 0
        %2519 = vmatprep.subr.bf16.mxu0 0
        %2520 = vmatpush2.bf16.msra.mxu0 0
        %2521 = vmatprep.subr.bf16.mxu0 0
        %2522 = vmatpush2.bf16.msra.mxu0 0
        %2523 = vmatprep.subr.bf16.mxu0 0
        %2524 = vmatpush2.bf16.msra.mxu0 0
        %2525 = vmatprep.subr.bf16.mxu0 0
        %2526 = vmatpush2.bf16.msra.mxu0 0
        %2527 = vmatprep.subr.bf16.mxu0 0
        %2528 = vmatpush2.bf16.msra.mxu0 0
        %2529 = vmatprep.mubr.bf16.mxu0 0
        %2530 = vmatmul.mubr.bf16.gmra.mxu0 %v2431
        %v2531 = vpop.f32.mrf.mxu0
        %v2532 = vadd.f32 %v2448, %v2531
        %v2533 = vpop.f32.mrf.mxu0
        %v2534 = vpop.f32.mrf.mxu0
        %v2535 = vpop.f32.mrf.mxu0
        %2536 = vdwg.mxu0
        %v2537 = vmax.f32 %v2532, 0.0
        %v2538 = vpack.c.bf16 %v2537, %v2537
        %v2539 = vld [vmem:[%s9] sm:$0xf]
        %v2540 = vld [vmem:[%s9 + $0x4] sm:$0xf]
        %v2541 = vld [vmem:[%s9 + $0x8] sm:$0xf]
        %v2542 = vld [vmem:[%s9 + $0xc] sm:$0xf]
        %v2543 = vld [vmem:[%s9 + $0x10] sm:$0xf]
        %v2544 = vld [vmem:[%s9 + $0x14] sm:$0xf]
        %v2545 = vld [vmem:[%s9 + $0x18] sm:$0xf]
        %v2546 = vld [vmem:[%s9 + $0x1c] sm:$0xf]
        %v2547 = vld [vmem:[%s9 + $0x20] sm:$0xf]
        %v2548 = vld [vmem:[%s9 + $0x24] sm:$0xf]
        %v2549 = vld [vmem:[%s9 + $0x28] sm:$0xf]
        %v2550 = vld [vmem:[%s9 + $0x2c] sm:$0xf]
        %v2551 = vld [vmem:[%s9 + $0x30] sm:$0xf]
        %v2552 = vld [vmem:[%s9 + $0x34] sm:$0xf]
        %v2553 = vld [vmem:[%s9 + $0x38] sm:$0xf]
        %v2554 = vld [vmem:[%s9 + $0x3c] sm:$0xf]
        %v2555 = vld [vmem:[%s10] sm:$0x1]
        %v2572 = vunpack.c.l.b16 %v2539
        %v2573 = vunpack.c.l.b16 %v2540
        %v2574 = vunpack.c.l.b16 %v2541
        %v2575 = vunpack.c.l.b16 %v2542
        %v2576 = vunpack.c.l.b16 %v2543
        %v2577 = vunpack.c.l.b16 %v2544
        %v2578 = vunpack.c.l.b16 %v2545
        %v2579 = vunpack.c.l.b16 %v2546
        %v2580 = vunpack.c.l.b16 %v2547
        %v2581 = vunpack.c.l.b16 %v2548
        %v2582 = vunpack.c.l.b16 %v2549
        %v2583 = vunpack.c.l.b16 %v2550
        %v2584 = vunpack.c.l.b16 %v2551
        %v2585 = vunpack.c.l.b16 %v2552
        %v2586 = vunpack.c.l.b16 %v2553
        %v2587 = vunpack.c.l.b16 %v2554
        %v2588 = vpack.c.b16 %v2573, %v2572
        %v2589 = vpack.c.b16 %v2575, %v2574
        %v2590 = vpack.c.b16 %v2577, %v2576
        %v2591 = vpack.c.b16 %v2579, %v2578
        %v2592 = vpack.c.b16 %v2581, %v2580
        %v2593 = vpack.c.b16 %v2583, %v2582
        %v2594 = vpack.c.b16 %v2585, %v2584
        %v2595 = vpack.c.b16 %v2587, %v2586
        %2604 = vmatprep.subr.bf16.mxu0 0
        %2605 = vmatpush1.bf16.msra.mxu0 %v2595
        %2606 = vmatprep.subr.bf16.mxu0 0
        %2607 = vmatpush1.bf16.msra.mxu0 %v2594
        %2608 = vmatprep.subr.bf16.mxu0 0
        %2609 = vmatpush1.bf16.msra.mxu0 %v2593
        %2610 = vmatprep.subr.bf16.mxu0 0
        %2611 = vmatpush1.bf16.msra.mxu0 %v2592
        %2612 = vmatprep.subr.bf16.mxu0 0
        %2613 = vmatpush1.bf16.msra.mxu0 %v2591
        %2614 = vmatprep.subr.bf16.mxu0 0
        %2615 = vmatpush1.bf16.msra.mxu0 %v2590
        %2616 = vmatprep.subr.bf16.mxu0 0
        %2617 = vmatpush1.bf16.msra.mxu0 %v2589
        %2618 = vmatprep.subr.bf16.mxu0 0
        %2619 = vmatpush1.bf16.msra.mxu0 %v2588
        %2620 = vmatprep.subr.bf16.mxu0 0
        %2621 = vmatpush2.bf16.msra.mxu0 0
        %2622 = vmatprep.subr.bf16.mxu0 0
        %2623 = vmatpush2.bf16.msra.mxu0 0
        %2624 = vmatprep.subr.bf16.mxu0 0
        %2625 = vmatpush2.bf16.msra.mxu0 0
        %2626 = vmatprep.subr.bf16.mxu0 0
        %2627 = vmatpush2.bf16.msra.mxu0 0
        %2628 = vmatprep.subr.bf16.mxu0 0
        %2629 = vmatpush2.bf16.msra.mxu0 0
        %2630 = vmatprep.subr.bf16.mxu0 0
        %2631 = vmatpush2.bf16.msra.mxu0 0
        %2632 = vmatprep.subr.bf16.mxu0 0
        %2633 = vmatpush2.bf16.msra.mxu0 0
        %2634 = vmatprep.subr.bf16.mxu0 0
        %2635 = vmatpush2.bf16.msra.mxu0 0
        %2636 = vmatprep.mubr.bf16.mxu0 0
        %2637 = vmatmul.mubr.bf16.gmra.mxu0 %v2538
        %v2638 = vpop.f32.mrf.mxu0
        %v2639 = vadd.f32 %v2555, %v2638
        %v2640 = vpop.f32.mrf.mxu0
        %v2641 = vpop.f32.mrf.mxu0
        %v2642 = vpop.f32.mrf.mxu0
        %2643 = vdwg.mxu0
        %2644 = vst [vmem:[%s378] sm:$0x1] %v2639
        %s2645 = sand.u32 %s269, 1
        %s2646 = scalar_lea.sflag [#allocation3], %s2645
        %s2647 = sand.u32 %s269, 1
        %s2648 = scalar_lea.vmem [#allocation2], %s2647
        // Predicated region
        $region65: #{convnet_forward.1} parent=63 // pred_check
          %p2649 = pneg %p279
        $region66: #{convnet_forward.1} parent=63 // pred_check_branch
          %2651 = sbr.rel (%p2649) target = $region68
        $region67: #{convnet_forward.1} parent=63 // pred_region
          %s2653 = ssub.s32 16, 16
          %2654 = vsyncadd %s2646, %s2653
          %s2655 = smul.addr %s25, 16
          %s2656 = scalar_lea.hbm %s11, %s2655
          %s2658 = sshll.u32 %s2648, 4
          %s2659 = int_to_ptr.vmem [resolvable:$true] %s2658
          %2661 = dma.vmem_to_hbm [thread:$0]  %s2659, 16, %s2656, %s2646
        $region68: #{convnet_forward.1} parent=63 // pred_fallthru
          _
      $region64: #{convnet_forward.1} parent=5 // pred_fallthru
        _
      %p2662 = scmp.le.s32.totalorder 2, %s20
      // Predicated region
      $region69: #{convnet_forward.1} parent=5 // pred_check
        %p2663 = pneg %p2662
      $region70: #{convnet_forward.1} parent=5 // pred_check_branch
        %2665 = sbr.rel (%p2663) target = $region72
      $region71: #{convnet_forward.1} parent=5 // pred_region
        %s2666 = ssub.s32 %s20, 2
        // Predicated region
        $region73: #{convnet_forward.1} parent=71 // pred_check
          %p2667 = pneg %p285
        $region74: #{convnet_forward.1} parent=71 // pred_check_branch
          %2669 = sbr.rel (%p2667) target = $region76
        $region75: #{convnet_forward.1} parent=71 // pred_region
          %s2670 = sand.u32 %s270, 1
          %s2671 = scalar_lea.sflag [#allocation3], %s2670
          %s2672 = sand.u32 %s270, 1
          %s2673 = scalar_lea.vmem [#allocation2], %s2672
          %2674 = dma.done %s2671, 16
        $region76: #{convnet_forward.1} parent=71 // pred_fallthru
          _
      $region72: #{convnet_forward.1} parent=5 // pred_fallthru
        _
    $region6: #{convnet_forward.1} parent=1 // loop_footer
      %s24 = sadd.s32 1, %s20
    $region7: #{convnet_forward.1} parent=1 // loop_footer_branch
      %19 = sbr.rel target = $region3
    $region8: #{convnet_forward.1} parent=1 // loop_exit
      _
    %2675 = vsyncpa [#allocation3], 1
    %s2676 = scalar_lea.sflag [#allocation3], 1
    %2677 = vsyncpa %s2676, 1

</llo_original>
